<compile_context>
chip_gen: v5e
topology: v5e:2x2
jax: 0.10.0
libtpu: 0.0.40
codegen_flags: <defaults>
</compile_context>

<pallas_src>
import functools

import jax
import jax.numpy as jnp
from jax import lax
from jax.experimental import pallas as pl
from jax.experimental.pallas import tpu as pltpu

_VMEM_LIMIT_BYTES = 32 * 1024 * 1024


# --------------------------------------------------------------------------- shared
def _gate_head(acc_f32, hist, b1_row, w2_row, b2_scalar, out_ref):
    """ReLU -> (H->1) projection on the VPU/XLU -> sigmoid -> gate multiply + store."""
    hidden = jnp.maximum(acc_f32 + b1_row, 0.0)                       # [tm, H]
    logit = jnp.sum(hidden * w2_row, axis=-1, keepdims=True) + b2_scalar
    gate = jax.nn.sigmoid(logit)                                      # [tm, 1]
    out_ref[...] = (hist.astype(jnp.float32) * gate).astype(out_ref.dtype)


def _pick_row_tile(m, cap=4096):
    """Largest row tile <= cap that divides m and is a multiple of 8 (else m)."""
    best = None
    t = 8
    lim = min(m, cap)
    while t <= lim:
        if m % t == 0:
            best = t
        t += 8
    return best if best is not None else m


# ----------------------------------------------------- primary: DMA-packed fused path
def _packed_kernel(col_offsets, n_inner, *refs):
    """out = hist * sigmoid(relu(packed @ W1 + b1) . w2 + b2), packed built by DMA."""
    n_feat = len(col_offsets) - 1                  # prior, observed x4, history
    feat_hbm = refs[:n_feat]                       # raw HBM refs (memory_space=ANY)
    w1_ref, b1_ref, w2_ref, b2_ref = refs[n_feat:n_feat + 4]
    out_ref = refs[n_feat + 4]
    packed_ref = refs[n_feat + 5]                  # [2, tm, Din] VMEM double buffer
    sem = refs[n_feat + 6]                         # DMA sems [2, n_feat]

    tm = out_ref.shape[0]
    j = pl.program_id(1)
    blk = pl.program_id(0) * n_inner + j           # global row-block index
    slot = j % 2

    def copies(block, buf):
        row0 = pl.multiple_of(block * tm, 8)
        cps = []
        for k in range(n_feat):
            c0, c1 = col_offsets[k], col_offsets[k + 1]
            cps.append(pltpu.make_async_copy(
                feat_hbm[k].at[pl.ds(row0, tm), :],
                packed_ref.at[buf, :, pl.ds(c0, c1 - c0)],
                sem.at[buf, k]))
        return cps

    @pl.when(j == 0)                               # prologue: fetch own first tile
    def _():
        for cp in copies(blk, slot):
            cp.start()

    @pl.when(j + 1 < pl.num_programs(1))           # prefetch next tile into other slot
    def _():
        for cp in copies(blk + 1, 1 - slot):
            cp.start()

    for cp in copies(blk, slot):                   # wait for current tile
        cp.wait()

    x = packed_ref[slot]                           # [tm, Din], history in last lanes
    acc = jnp.dot(x, w1_ref[...], preferred_element_type=jnp.float32)
    hist = x[:, col_offsets[-2]:col_offsets[-1]]   # history reused for gate multiply
    _gate_head(acc, hist, b1_ref[...], w2_ref[...], b2_ref[0], out_ref)


def _gate_pallas_packed(feats2d, col, w1, b1_row, w2_row, b2_s, *, tm, out_dtype):
    m = feats2d[0].shape[0]
    e = feats2d[-1].shape[1]
    din, h = w1.shape
    n_steps = m // tm
    n_outer = 2 if (n_steps >= 2 and n_steps % 2 == 0) else 1   # 2 TCs on v7x
    n_inner = n_steps // n_outer

    kernel = functools.partial(_packed_kernel, tuple(col), n_inner)
    feat_specs = [pl.BlockSpec(memory_space=pl.ANY) for _ in feats2d]
    return pl.pallas_call(
        kernel,
        out_shape=jax.ShapeDtypeStruct((m, e), out_dtype),
        grid_spec=pltpu.PrefetchScalarGridSpec(
            num_scalar_prefetch=0,
            grid=(n_outer, n_inner),
            in_specs=feat_specs + [
                pl.BlockSpec((din, h), lambda o, j: (0, 0)),    # W1 (fetched once)
                pl.BlockSpec((1, h), lambda o, j: (0, 0)),      # b1 row
                pl.BlockSpec((1, h), lambda o, j: (0, 0)),      # w2 as a row
                pl.BlockSpec(memory_space=pltpu.SMEM),          # b2 scalar in SMEM
            ],
            out_specs=pl.BlockSpec((tm, e), lambda o, j: (o * n_inner + j, 0)),
            scratch_shapes=[
                pltpu.VMEM((2, tm, din), feats2d[0].dtype),
                pltpu.SemaphoreType.DMA((2, len(feats2d))),
            ]),
        compiler_params=pltpu.CompilerParams(
            dimension_semantics=("parallel", "arbitrary"),
            vmem_limit_bytes=_VMEM_LIMIT_BYTES),
    )(*feats2d, w1, b1_row, w2_row, b2_s)


# --------------------------------------------------- fallback: proven split-K path
def _splitk_kernel(col_offsets, *refs):
    n_feat = len(col_offsets) - 1
    feats = refs[:n_feat]
    w1_ref, b1_ref, w2_ref, b2_ref = refs[n_feat:n_feat + 4]
    out_ref = refs[n_feat + 4]

    hist = feats[-1][...]
    vals = [feats[i][...] for i in range(n_feat - 1)] + [hist]
    acc = None
    for i, v in enumerate(vals):
        part = jnp.dot(v, w1_ref[col_offsets[i]:col_offsets[i + 1], :],
                       preferred_element_type=jnp.float32)
        acc = part if acc is None else acc + part
    _gate_head(acc, hist, b1_ref[...], w2_ref[...], b2_ref[0], out_ref)


def _gate_pallas_splitk(feats2d, col, w1, b1_row, w2_row, b2_s, *, tm, out_dtype):
    m = feats2d[0].shape[0]
    e = feats2d[-1].shape[1]
    din, h = w1.shape
    col_sizes = [f.shape[1] for f in feats2d]
    kernel = functools.partial(_splitk_kernel, tuple(col))
    feat_specs = [pl.BlockSpec((tm, c), lambda i: (i, 0)) for c in col_sizes]
    return pl.pallas_call(
        kernel,
        out_shape=jax.ShapeDtypeStruct((m, e), out_dtype),
        grid_spec=pltpu.PrefetchScalarGridSpec(
            num_scalar_prefetch=0,
            grid=(pl.cdiv(m, tm),),
            in_specs=feat_specs + [
                pl.BlockSpec((din, h), lambda i: (0, 0)),
                pl.BlockSpec((1, h), lambda i: (0, 0)),
                pl.BlockSpec((1, h), lambda i: (0, 0)),
                pl.BlockSpec(memory_space=pltpu.SMEM),
            ],
            out_specs=pl.BlockSpec((tm, e), lambda i: (i, 0)),
        ),
        compiler_params=pltpu.CompilerParams(
            dimension_semantics=("parallel",),
            vmem_limit_bytes=_VMEM_LIMIT_BYTES),
    )(*feats2d, w1, b1_row, w2_row, b2_s)


# ------------------------------------------------------------------------- wrapper
def estimation_gate_forward(prior, observed_dict, history_data, w1, b1, w2, b2,
                            observed_keys=None):
    """JAX/Pallas equivalent of EstimationGate.forward.

    prior:         [B, Tp, N, feature_emb_dim]
    observed_dict: dict of [B, To, N, feature_emb_dim] arrays (concat order = key order)
    history_data:  [B, L, N, encoder_dim]
    w1: [Din, H], b1: [H], w2: [H, 1], b2: [1]   (Linear weights stored as [in, out])
    """
    b, l, n, e = history_data.shape
    din, h = w1.shape
    if observed_keys is None:
        # Matches `torch.cat([v for k, v in Observed.items()], dim=-1)` insertion order.
        observed_keys = list(observed_dict.keys())

    feats = ([prior[:, -l:]] +
             [observed_dict[k][:, -l:] for k in observed_keys] +
             [history_data])
    m = b * l * n
    cdt = history_data.dtype
    feats2d = [f.reshape(m, f.shape[-1]).astype(cdt) for f in feats]
    col = [0]
    for f in feats2d:
        col.append(col[-1] + f.shape[1])
    assert col[-1] == din, "W1 rows must match total feature channels"

    w1c = w1.astype(cdt)                          # activation dtype for MXU LHS/RHS
    b1_row = b1.reshape(1, h).astype(jnp.float32)
    w2_row = w2.reshape(1, h).astype(jnp.float32)
    b2_s = b2.reshape(1).astype(jnp.float32)

    tm = _pick_row_tile(m, cap=4096)
    try:
        out2d = _gate_pallas_packed(feats2d, col, w1c, b1_row, w2_row, b2_s,
                                    tm=tm, out_dtype=cdt)
        out2d = jax.block_until_ready(out2d)
    except Exception:
        # TODO(synk): remove once sub-128-lane-offset DMA destination windows are
        # confirmed on the target Mosaic build (safety net so the op always runs).
        tm_fb = _pick_row_tile(m, cap=1024)
        out2d = _gate_pallas_splitk(feats2d, col, w1c, b1_row, w2_row, b2_s,
                                    tm=tm_fb, out_dtype=cdt)
    # The [:, -L:] slice on the gate is a no-op (gate already has L timesteps).
    return out2d.reshape(b, l, n, e)


def _reference(prior, observed_dict, history_data, w1, b1, w2, b2):
    l = history_data.shape[1]
    observed = jnp.concatenate([v for _, v in observed_dict.items()], axis=-1)
    feat = jnp.concatenate([prior[:, -l:], observed[:, -l:], history_data], axis=-1)
    hidden = jnp.maximum(feat @ w1 + b1, 0.0)
    gate = jax.nn.sigmoid(hidden @ w2 + b2)[:, -l:, :, :]
    return history_data * gate


if __name__ == "__main__":
    # Module hyper-params (synthetic, deterministic init).
    feature_emb_dim = 8
    encoder_dim = 16
    hidden_dim = 32
    B, N = 2, 4                        # batch, nodes
    L = 8                              # history seq length
    T_long = 12                        # Prior / Observed seq length (>= L)

    Din = feature_emb_dim * 5 + encoder_dim   # Prior + 4 Observed + history channels

    key = jax.random.PRNGKey(0)
    ks = jax.random.split(key, 10)

    prior = jax.random.normal(ks[0], (B, T_long, N, feature_emb_dim), jnp.float32)
    observed = {
        "SYMH": jax.random.normal(ks[1], (B, T_long, N, feature_emb_dim), jnp.float32),
        "ASYH": jax.random.normal(ks[2], (B, T_long, N, feature_emb_dim), jnp.float32),
        "F107": jax.random.normal(ks[3], (B, T_long, N, feature_emb_dim), jnp.float32),
        "KP":   jax.random.normal(ks[4], (B, T_long, N, feature_emb_dim), jnp.float32),
    }
    history_data = jax.random.normal(ks[5], (B, L, N, encoder_dim), jnp.float32)

    # Deterministic parameter init (Linear weights stored as [in, out]).
    w1 = 0.1 * jax.random.normal(ks[6], (Din, hidden_dim), jnp.float32)
    b1 = 0.1 * jax.random.normal(ks[7], (hidden_dim,), jnp.float32)
    w2 = 0.1 * jax.random.normal(ks[8], (hidden_dim, 1), jnp.float32)
    b2 = 0.1 * jax.random.normal(ks[9], (1,), jnp.float32)

    out = estimation_gate_forward(prior, observed, history_data, w1, b1, w2, b2)
    out = jax.block_until_ready(out)

    ref = _reference(prior, observed, history_data, w1, b1, w2, b2)
    assert out.shape == history_data.shape
    assert jnp.allclose(out, ref, atol=1e-5, rtol=1e-5), "mismatch vs reference"

    print("KERNEL_OK")
</pallas_src>

<mosaic_0001>
module attributes {stable_mosaic.version = 11 : i64} {
  func.func @_packed_kernel(%arg0: i32, %arg1: i32, %arg2: memref<64x8xf32, #tpu.memory_space<any>>, %arg3: memref<64x8xf32, #tpu.memory_space<any>>, %arg4: memref<64x8xf32, #tpu.memory_space<any>>, %arg5: memref<64x8xf32, #tpu.memory_space<any>>, %arg6: memref<64x8xf32, #tpu.memory_space<any>>, %arg7: memref<64x16xf32, #tpu.memory_space<any>>, %arg8: memref<56x32xf32, #tpu.memory_space<vmem>>, %arg9: memref<1x32xf32, #tpu.memory_space<vmem>>, %arg10: memref<1x32xf32, #tpu.memory_space<vmem>>, %arg11: memref<1xf32, #tpu.memory_space<smem>>, %arg12: memref<64x16xf32, #tpu.memory_space<vmem>>, %arg13: memref<2x64x56xf32, #tpu.memory_space<vmem>>, %arg14: memref<2x6x!tpu.dma_semaphore, #tpu.memory_space<semaphore_mem>>) attributes {dimension_semantics = [#tpu.dimension_semantics<parallel>, #tpu.dimension_semantics<arbitrary>], iteration_bounds = array<i64: 1, 1>, scalar_prefetch = 0 : i64, scratch_operands = 2 : i64, tpu.core_type = #tpu.core_type<tc>, window_params = [{}, {}, {}, {}, {}, {}, {pipeline_mode = #tpu.pipeline_mode<synchronous>, transform_indices = @transform_6, window_bounds = array<i64: 56, 32>}, {pipeline_mode = #tpu.pipeline_mode<synchronous>, transform_indices = @transform_7, window_bounds = array<i64: 1, 32>}, {pipeline_mode = #tpu.pipeline_mode<synchronous>, transform_indices = @transform_8, window_bounds = array<i64: 1, 32>}, {transform_indices = @transform_9, window_bounds = array<i64: 1>}, {transform_indices = @transform_10, window_bounds = array<i64: 64, 16>}]} {
    %c1_i32 = arith.constant 1 : i32
    %0 = arith.muli %arg0, %c1_i32 : i32
    %1 = arith.addi %0, %arg1 : i32
    %c2_i32 = arith.constant 2 : i32
    %c0_i32 = arith.constant 0 : i32
    %2 = arith.cmpi eq, %c2_i32, %c0_i32 : i32
    %c1_i32_0 = arith.constant 1 : i32
    %3 = arith.select %2, %c1_i32_0, %c2_i32 : i32
    %4 = arith.remsi %arg1, %3 : i32
    %c0_i32_1 = arith.constant 0 : i32
    %5 = arith.cmpi ne, %4, %c0_i32_1 : i32
    %c0_i32_2 = arith.constant 0 : i32
    %6 = arith.cmpi slt, %4, %c0_i32_2 : i32
    %c0_i32_3 = arith.constant 0 : i32
    %7 = arith.cmpi slt, %3, %c0_i32_3 : i32
    %8 = arith.xori %6, %7 : i1
    %9 = arith.andi %8, %5 : i1
    %10 = arith.addi %4, %3 : i32
    %11 = arith.select %9, %10, %4 : i32
    %c0_i32_4 = arith.constant 0 : i32
    %12 = arith.cmpi eq, %arg1, %c0_i32_4 : i32
    %13 = arith.extui %12 : i1 to i32
    %c0_i32_5 = arith.constant 0 : i32
    %14 = arith.cmpi ne, %13, %c0_i32_5 : i32
    scf.if %14 {
      %c64_i32_38 = arith.constant 64 : i32
      %78 = arith.muli %1, %c64_i32_38 : i32
      %79 = tpu.assume_multiple %78, 8 : i32
      %c0_i32_39 = arith.constant 0 : i32
      %c0_i32_40 = arith.constant 0 : i32
      %80 = tpu.memref_slice %arg2[%79, %c0_i32_40] : memref<64x8xf32, #tpu.memory_space<any>> -> memref<64x8xf32, #tpu.memory_space<any>>
      %c0_i32_41 = arith.constant 0 : i32
      %c0_i32_42 = arith.constant 0 : i32
      %81 = tpu.memref_slice %arg13[%11, %c0_i32_41, %c0_i32_42] : memref<2x64x56xf32, #tpu.memory_space<vmem>> -> memref<1x64x8xf32, #tpu.memory_space<vmem>>
      %82 = tpu.memref_squeeze %81 : memref<1x64x8xf32, #tpu.memory_space<vmem>> -> memref<64x8xf32, #tpu.memory_space<vmem>>
      %83 = tpu.memref_slice %arg14[%11, %c0_i32_39] : memref<2x6x!tpu.dma_semaphore, #tpu.memory_space<semaphore_mem>> -> memref<1x1x!tpu.dma_semaphore, #tpu.memory_space<semaphore_mem>>
      %84 = tpu.memref_squeeze %83 : memref<1x1x!tpu.dma_semaphore, #tpu.memory_space<semaphore_mem>> -> memref<!tpu.dma_semaphore, #tpu.memory_space<semaphore_mem>>
      tpu.enqueue_dma source(%80 : memref<64x8xf32, #tpu.memory_space<any>>) target(%82 : memref<64x8xf32, #tpu.memory_space<vmem>>) target_semaphore(%84 : memref<!tpu.dma_semaphore, #tpu.memory_space<semaphore_mem>>)
      %c1_i32_43 = arith.constant 1 : i32
      %c0_i32_44 = arith.constant 0 : i32
      %85 = tpu.memref_slice %arg3[%79, %c0_i32_44] : memref<64x8xf32, #tpu.memory_space<any>> -> memref<64x8xf32, #tpu.memory_space<any>>
      %c0_i32_45 = arith.constant 0 : i32
      %c8_i32_46 = arith.constant 8 : i32
      %86 = tpu.memref_slice %arg13[%11, %c0_i32_45, %c8_i32_46] : memref<2x64x56xf32, #tpu.memory_space<vmem>> -> memref<1x64x8xf32, #tpu.memory_space<vmem>>
      %87 = tpu.memref_squeeze %86 : memref<1x64x8xf32, #tpu.memory_space<vmem>> -> memref<64x8xf32, #tpu.memory_space<vmem>>
      %88 = tpu.memref_slice %arg14[%11, %c1_i32_43] : memref<2x6x!tpu.dma_semaphore, #tpu.memory_space<semaphore_mem>> -> memref<1x1x!tpu.dma_semaphore, #tpu.memory_space<semaphore_mem>>
      %89 = tpu.memref_squeeze %88 : memref<1x1x!tpu.dma_semaphore, #tpu.memory_space<semaphore_mem>> -> memref<!tpu.dma_semaphore, #tpu.memory_space<semaphore_mem>>
      tpu.enqueue_dma source(%85 : memref<64x8xf32, #tpu.memory_space<any>>) target(%87 : memref<64x8xf32, #tpu.memory_space<vmem>>) target_semaphore(%89 : memref<!tpu.dma_semaphore, #tpu.memory_space<semaphore_mem>>)
      %c2_i32_47 = arith.constant 2 : i32
      %c0_i32_48 = arith.constant 0 : i32
      %90 = tpu.memref_slice %arg4[%79, %c0_i32_48] : memref<64x8xf32, #tpu.memory_space<any>> -> memref<64x8xf32, #tpu.memory_space<any>>
      %c0_i32_49 = arith.constant 0 : i32
      %c16_i32_50 = arith.constant 16 : i32
      %91 = tpu.memref_slice %arg13[%11, %c0_i32_49, %c16_i32_50] : memref<2x64x56xf32, #tpu.memory_space<vmem>> -> memref<1x64x8xf32, #tpu.memory_space<vmem>>
      %92 = tpu.memref_squeeze %91 : memref<1x64x8xf32, #tpu.memory_space<vmem>> -> memref<64x8xf32, #tpu.memory_space<vmem>>
      %93 = tpu.memref_slice %arg14[%11, %c2_i32_47] : memref<2x6x!tpu.dma_semaphore, #tpu.memory_space<semaphore_mem>> -> memref<1x1x!tpu.dma_semaphore, #tpu.memory_space<semaphore_mem>>
      %94 = tpu.memref_squeeze %93 : memref<1x1x!tpu.dma_semaphore, #tpu.memory_space<semaphore_mem>> -> memref<!tpu.dma_semaphore, #tpu.memory_space<semaphore_mem>>
      tpu.enqueue_dma source(%90 : memref<64x8xf32, #tpu.memory_space<any>>) target(%92 : memref<64x8xf32, #tpu.memory_space<vmem>>) target_semaphore(%94 : memref<!tpu.dma_semaphore, #tpu.memory_space<semaphore_mem>>)
      %c3_i32_51 = arith.constant 3 : i32
      %c0_i32_52 = arith.constant 0 : i32
      %95 = tpu.memref_slice %arg5[%79, %c0_i32_52] : memref<64x8xf32, #tpu.memory_space<any>> -> memref<64x8xf32, #tpu.memory_space<any>>
      %c0_i32_53 = arith.constant 0 : i32
      %c24_i32_54 = arith.constant 24 : i32
      %96 = tpu.memref_slice %arg13[%11, %c0_i32_53, %c24_i32_54] : memref<2x64x56xf32, #tpu.memory_space<vmem>> -> memref<1x64x8xf32, #tpu.memory_space<vmem>>
      %97 = tpu.memref_squeeze %96 : memref<1x64x8xf32, #tpu.memory_space<vmem>> -> memref<64x8xf32, #tpu.memory_space<vmem>>
      %98 = tpu.memref_slice %arg14[%11, %c3_i32_51] : memref<2x6x!tpu.dma_semaphore, #tpu.memory_space<semaphore_mem>> -> memref<1x1x!tpu.dma_semaphore, #tpu.memory_space<semaphore_mem>>
      %99 = tpu.memref_squeeze %98 : memref<1x1x!tpu.dma_semaphore, #tpu.memory_space<semaphore_mem>> -> memref<!tpu.dma_semaphore, #tpu.memory_space<semaphore_mem>>
      tpu.enqueue_dma source(%95 : memref<64x8xf32, #tpu.memory_space<any>>) target(%97 : memref<64x8xf32, #tpu.memory_space<vmem>>) target_semaphore(%99 : memref<!tpu.dma_semaphore, #tpu.memory_space<semaphore_mem>>)
      %c4_i32_55 = arith.constant 4 : i32
      %c0_i32_56 = arith.constant 0 : i32
      %100 = tpu.memref_slice %arg6[%79, %c0_i32_56] : memref<64x8xf32, #tpu.memory_space<any>> -> memref<64x8xf32, #tpu.memory_space<any>>
      %c0_i32_57 = arith.constant 0 : i32
      %c32_i32_58 = arith.constant 32 : i32
      %101 = tpu.memref_slice %arg13[%11, %c0_i32_57, %c32_i32_58] : memref<2x64x56xf32, #tpu.memory_space<vmem>> -> memref<1x64x8xf32, #tpu.memory_space<vmem>>
      %102 = tpu.memref_squeeze %101 : memref<1x64x8xf32, #tpu.memory_space<vmem>> -> memref<64x8xf32, #tpu.memory_space<vmem>>
      %103 = tpu.memref_slice %arg14[%11, %c4_i32_55] : memref<2x6x!tpu.dma_semaphore, #tpu.memory_space<semaphore_mem>> -> memref<1x1x!tpu.dma_semaphore, #tpu.memory_space<semaphore_mem>>
      %104 = tpu.memref_squeeze %103 : memref<1x1x!tpu.dma_semaphore, #tpu.memory_space<semaphore_mem>> -> memref<!tpu.dma_semaphore, #tpu.memory_space<semaphore_mem>>
      tpu.enqueue_dma source(%100 : memref<64x8xf32, #tpu.memory_space<any>>) target(%102 : memref<64x8xf32, #tpu.memory_space<vmem>>) target_semaphore(%104 : memref<!tpu.dma_semaphore, #tpu.memory_space<semaphore_mem>>)
      %c5_i32_59 = arith.constant 5 : i32
      %c0_i32_60 = arith.constant 0 : i32
      %105 = tpu.memref_slice %arg7[%79, %c0_i32_60] : memref<64x16xf32, #tpu.memory_space<any>> -> memref<64x16xf32, #tpu.memory_space<any>>
      %c0_i32_61 = arith.constant 0 : i32
      %c40_i32_62 = arith.constant 40 : i32
      %106 = tpu.memref_slice %arg13[%11, %c0_i32_61, %c40_i32_62] : memref<2x64x56xf32, #tpu.memory_space<vmem>> -> memref<1x64x16xf32, #tpu.memory_space<vmem>>
      %107 = tpu.memref_squeeze %106 : memref<1x64x16xf32, #tpu.memory_space<vmem>> -> memref<64x16xf32, #tpu.memory_space<vmem>>
      %108 = tpu.memref_slice %arg14[%11, %c5_i32_59] : memref<2x6x!tpu.dma_semaphore, #tpu.memory_space<semaphore_mem>> -> memref<1x1x!tpu.dma_semaphore, #tpu.memory_space<semaphore_mem>>
      %109 = tpu.memref_squeeze %108 : memref<1x1x!tpu.dma_semaphore, #tpu.memory_space<semaphore_mem>> -> memref<!tpu.dma_semaphore, #tpu.memory_space<semaphore_mem>>
      tpu.enqueue_dma source(%105 : memref<64x16xf32, #tpu.memory_space<any>>) target(%107 : memref<64x16xf32, #tpu.memory_space<vmem>>) target_semaphore(%109 : memref<!tpu.dma_semaphore, #tpu.memory_space<semaphore_mem>>)
    } else {
    }
    %c1_i32_6 = arith.constant 1 : i32
    %15 = arith.addi %arg1, %c1_i32_6 : i32
    %c1_i32_7 = arith.constant 1 : i32
    %16 = arith.cmpi slt, %15, %c1_i32_7 : i32
    %17 = arith.extui %16 : i1 to i32
    %c0_i32_8 = arith.constant 0 : i32
    %18 = arith.cmpi ne, %17, %c0_i32_8 : i32
    scf.if %18 {
      %c1_i32_38 = arith.constant 1 : i32
      %78 = arith.addi %1, %c1_i32_38 : i32
      %c1_i32_39 = arith.constant 1 : i32
      %79 = arith.subi %c1_i32_39, %11 : i32
      %c64_i32_40 = arith.constant 64 : i32
      %80 = arith.muli %78, %c64_i32_40 : i32
      %81 = tpu.assume_multiple %80, 8 : i32
      %c0_i32_41 = arith.constant 0 : i32
      %c0_i32_42 = arith.constant 0 : i32
      %82 = tpu.memref_slice %arg2[%81, %c0_i32_42] : memref<64x8xf32, #tpu.memory_space<any>> -> memref<64x8xf32, #tpu.memory_space<any>>
      %c0_i32_43 = arith.constant 0 : i32
      %c0_i32_44 = arith.constant 0 : i32
      %83 = tpu.memref_slice %arg13[%79, %c0_i32_43, %c0_i32_44] : memref<2x64x56xf32, #tpu.memory_space<vmem>> -> memref<1x64x8xf32, #tpu.memory_space<vmem>>
      %84 = tpu.memref_squeeze %83 : memref<1x64x8xf32, #tpu.memory_space<vmem>> -> memref<64x8xf32, #tpu.memory_space<vmem>>
      %85 = tpu.memref_slice %arg14[%79, %c0_i32_41] : memref<2x6x!tpu.dma_semaphore, #tpu.memory_space<semaphore_mem>> -> memref<1x1x!tpu.dma_semaphore, #tpu.memory_space<semaphore_mem>>
      %86 = tpu.memref_squeeze %85 : memref<1x1x!tpu.dma_semaphore, #tpu.memory_space<semaphore_mem>> -> memref<!tpu.dma_semaphore, #tpu.memory_space<semaphore_mem>>
      tpu.enqueue_dma source(%82 : memref<64x8xf32, #tpu.memory_space<any>>) target(%84 : memref<64x8xf32, #tpu.memory_space<vmem>>) target_semaphore(%86 : memref<!tpu.dma_semaphore, #tpu.memory_space<semaphore_mem>>)
      %c1_i32_45 = arith.constant 1 : i32
      %c0_i32_46 = arith.constant 0 : i32
      %87 = tpu.memref_slice %arg3[%81, %c0_i32_46] : memref<64x8xf32, #tpu.memory_space<any>> -> memref<64x8xf32, #tpu.memory_space<any>>
      %c0_i32_47 = arith.constant 0 : i32
      %c8_i32_48 = arith.constant 8 : i32
      %88 = tpu.memref_slice %arg13[%79, %c0_i32_47, %c8_i32_48] : memref<2x64x56xf32, #tpu.memory_space<vmem>> -> memref<1x64x8xf32, #tpu.memory_space<vmem>>
      %89 = tpu.memref_squeeze %88 : memref<1x64x8xf32, #tpu.memory_space<vmem>> -> memref<64x8xf32, #tpu.memory_space<vmem>>
      %90 = tpu.memref_slice %arg14[%79, %c1_i32_45] : memref<2x6x!tpu.dma_semaphore, #tpu.memory_space<semaphore_mem>> -> memref<1x1x!tpu.dma_semaphore, #tpu.memory_space<semaphore_mem>>
      %91 = tpu.memref_squeeze %90 : memref<1x1x!tpu.dma_semaphore, #tpu.memory_space<semaphore_mem>> -> memref<!tpu.dma_semaphore, #tpu.memory_space<semaphore_mem>>
      tpu.enqueue_dma source(%87 : memref<64x8xf32, #tpu.memory_space<any>>) target(%89 : memref<64x8xf32, #tpu.memory_space<vmem>>) target_semaphore(%91 : memref<!tpu.dma_semaphore, #tpu.memory_space<semaphore_mem>>)
      %c2_i32_49 = arith.constant 2 : i32
      %c0_i32_50 = arith.constant 0 : i32
      %92 = tpu.memref_slice %arg4[%81, %c0_i32_50] : memref<64x8xf32, #tpu.memory_space<any>> -> memref<64x8xf32, #tpu.memory_space<any>>
      %c0_i32_51 = arith.constant 0 : i32
      %c16_i32_52 = arith.constant 16 : i32
      %93 = tpu.memref_slice %arg13[%79, %c0_i32_51, %c16_i32_52] : memref<2x64x56xf32, #tpu.memory_space<vmem>> -> memref<1x64x8xf32, #tpu.memory_space<vmem>>
      %94 = tpu.memref_squeeze %93 : memref<1x64x8xf32, #tpu.memory_space<vmem>> -> memref<64x8xf32, #tpu.memory_space<vmem>>
      %95 = tpu.memref_slice %arg14[%79, %c2_i32_49] : memref<2x6x!tpu.dma_semaphore, #tpu.memory_space<semaphore_mem>> -> memref<1x1x!tpu.dma_semaphore, #tpu.memory_space<semaphore_mem>>
      %96 = tpu.memref_squeeze %95 : memref<1x1x!tpu.dma_semaphore, #tpu.memory_space<semaphore_mem>> -> memref<!tpu.dma_semaphore, #tpu.memory_space<semaphore_mem>>
      tpu.enqueue_dma source(%92 : memref<64x8xf32, #tpu.memory_space<any>>) target(%94 : memref<64x8xf32, #tpu.memory_space<vmem>>) target_semaphore(%96 : memref<!tpu.dma_semaphore, #tpu.memory_space<semaphore_mem>>)
      %c3_i32_53 = arith.constant 3 : i32
      %c0_i32_54 = arith.constant 0 : i32
      %97 = tpu.memref_slice %arg5[%81, %c0_i32_54] : memref<64x8xf32, #tpu.memory_space<any>> -> memref<64x8xf32, #tpu.memory_space<any>>
      %c0_i32_55 = arith.constant 0 : i32
      %c24_i32_56 = arith.constant 24 : i32
      %98 = tpu.memref_slice %arg13[%79, %c0_i32_55, %c24_i32_56] : memref<2x64x56xf32, #tpu.memory_space<vmem>> -> memref<1x64x8xf32, #tpu.memory_space<vmem>>
      %99 = tpu.memref_squeeze %98 : memref<1x64x8xf32, #tpu.memory_space<vmem>> -> memref<64x8xf32, #tpu.memory_space<vmem>>
      %100 = tpu.memref_slice %arg14[%79, %c3_i32_53] : memref<2x6x!tpu.dma_semaphore, #tpu.memory_space<semaphore_mem>> -> memref<1x1x!tpu.dma_semaphore, #tpu.memory_space<semaphore_mem>>
      %101 = tpu.memref_squeeze %100 : memref<1x1x!tpu.dma_semaphore, #tpu.memory_space<semaphore_mem>> -> memref<!tpu.dma_semaphore, #tpu.memory_space<semaphore_mem>>
      tpu.enqueue_dma source(%97 : memref<64x8xf32, #tpu.memory_space<any>>) target(%99 : memref<64x8xf32, #tpu.memory_space<vmem>>) target_semaphore(%101 : memref<!tpu.dma_semaphore, #tpu.memory_space<semaphore_mem>>)
      %c4_i32_57 = arith.constant 4 : i32
      %c0_i32_58 = arith.constant 0 : i32
      %102 = tpu.memref_slice %arg6[%81, %c0_i32_58] : memref<64x8xf32, #tpu.memory_space<any>> -> memref<64x8xf32, #tpu.memory_space<any>>
      %c0_i32_59 = arith.constant 0 : i32
      %c32_i32_60 = arith.constant 32 : i32
      %103 = tpu.memref_slice %arg13[%79, %c0_i32_59, %c32_i32_60] : memref<2x64x56xf32, #tpu.memory_space<vmem>> -> memref<1x64x8xf32, #tpu.memory_space<vmem>>
      %104 = tpu.memref_squeeze %103 : memref<1x64x8xf32, #tpu.memory_space<vmem>> -> memref<64x8xf32, #tpu.memory_space<vmem>>
      %105 = tpu.memref_slice %arg14[%79, %c4_i32_57] : memref<2x6x!tpu.dma_semaphore, #tpu.memory_space<semaphore_mem>> -> memref<1x1x!tpu.dma_semaphore, #tpu.memory_space<semaphore_mem>>
      %106 = tpu.memref_squeeze %105 : memref<1x1x!tpu.dma_semaphore, #tpu.memory_space<semaphore_mem>> -> memref<!tpu.dma_semaphore, #tpu.memory_space<semaphore_mem>>
      tpu.enqueue_dma source(%102 : memref<64x8xf32, #tpu.memory_space<any>>) target(%104 : memref<64x8xf32, #tpu.memory_space<vmem>>) target_semaphore(%106 : memref<!tpu.dma_semaphore, #tpu.memory_space<semaphore_mem>>)
      %c5_i32_61 = arith.constant 5 : i32
      %c0_i32_62 = arith.constant 0 : i32
      %107 = tpu.memref_slice %arg7[%81, %c0_i32_62] : memref<64x16xf32, #tpu.memory_space<any>> -> memref<64x16xf32, #tpu.memory_space<any>>
      %c0_i32_63 = arith.constant 0 : i32
      %c40_i32_64 = arith.constant 40 : i32
      %108 = tpu.memref_slice %arg13[%79, %c0_i32_63, %c40_i32_64] : memref<2x64x56xf32, #tpu.memory_space<vmem>> -> memref<1x64x16xf32, #tpu.memory_space<vmem>>
      %109 = tpu.memref_squeeze %108 : memref<1x64x16xf32, #tpu.memory_space<vmem>> -> memref<64x16xf32, #tpu.memory_space<vmem>>
      %110 = tpu.memref_slice %arg14[%79, %c5_i32_61] : memref<2x6x!tpu.dma_semaphore, #tpu.memory_space<semaphore_mem>> -> memref<1x1x!tpu.dma_semaphore, #tpu.memory_space<semaphore_mem>>
      %111 = tpu.memref_squeeze %110 : memref<1x1x!tpu.dma_semaphore, #tpu.memory_space<semaphore_mem>> -> memref<!tpu.dma_semaphore, #tpu.memory_space<semaphore_mem>>
      tpu.enqueue_dma source(%107 : memref<64x16xf32, #tpu.memory_space<any>>) target(%109 : memref<64x16xf32, #tpu.memory_space<vmem>>) target_semaphore(%111 : memref<!tpu.dma_semaphore, #tpu.memory_space<semaphore_mem>>)
    } else {
    }
    %c64_i32 = arith.constant 64 : i32
    %19 = arith.muli %1, %c64_i32 : i32
    %20 = tpu.assume_multiple %19, 8 : i32
    %c0_i32_9 = arith.constant 0 : i32
    %c0_i32_10 = arith.constant 0 : i32
    %21 = tpu.memref_slice %arg2[%20, %c0_i32_10] : memref<64x8xf32, #tpu.memory_space<any>> -> memref<64x8xf32, #tpu.memory_space<any>>
    %c0_i32_11 = arith.constant 0 : i32
    %c0_i32_12 = arith.constant 0 : i32
    %22 = tpu.memref_slice %arg13[%11, %c0_i32_11, %c0_i32_12] : memref<2x64x56xf32, #tpu.memory_space<vmem>> -> memref<1x64x8xf32, #tpu.memory_space<vmem>>
    %23 = tpu.memref_squeeze %22 : memref<1x64x8xf32, #tpu.memory_space<vmem>> -> memref<64x8xf32, #tpu.memory_space<vmem>>
    %24 = tpu.memref_slice %arg14[%11, %c0_i32_9] : memref<2x6x!tpu.dma_semaphore, #tpu.memory_space<semaphore_mem>> -> memref<1x1x!tpu.dma_semaphore, #tpu.memory_space<semaphore_mem>>
    %25 = tpu.memref_squeeze %24 : memref<1x1x!tpu.dma_semaphore, #tpu.memory_space<semaphore_mem>> -> memref<!tpu.dma_semaphore, #tpu.memory_space<semaphore_mem>>
    tpu.wait_dma2 semaphore(%25 : memref<!tpu.dma_semaphore, #tpu.memory_space<semaphore_mem>>) src(%21 : memref<64x8xf32, #tpu.memory_space<any>>) dst(%23 : memref<64x8xf32, #tpu.memory_space<vmem>>)
    %c1_i32_13 = arith.constant 1 : i32
    %c0_i32_14 = arith.constant 0 : i32
    %26 = tpu.memref_slice %arg3[%20, %c0_i32_14] : memref<64x8xf32, #tpu.memory_space<any>> -> memref<64x8xf32, #tpu.memory_space<any>>
    %c0_i32_15 = arith.constant 0 : i32
    %c8_i32 = arith.constant 8 : i32
    %27 = tpu.memref_slice %arg13[%11, %c0_i32_15, %c8_i32] : memref<2x64x56xf32, #tpu.memory_space<vmem>> -> memref<1x64x8xf32, #tpu.memory_space<vmem>>
    %28 = tpu.memref_squeeze %27 : memref<1x64x8xf32, #tpu.memory_space<vmem>> -> memref<64x8xf32, #tpu.memory_space<vmem>>
    %29 = tpu.memref_slice %arg14[%11, %c1_i32_13] : memref<2x6x!tpu.dma_semaphore, #tpu.memory_space<semaphore_mem>> -> memref<1x1x!tpu.dma_semaphore, #tpu.memory_space<semaphore_mem>>
    %30 = tpu.memref_squeeze %29 : memref<1x1x!tpu.dma_semaphore, #tpu.memory_space<semaphore_mem>> -> memref<!tpu.dma_semaphore, #tpu.memory_space<semaphore_mem>>
    tpu.wait_dma2 semaphore(%30 : memref<!tpu.dma_semaphore, #tpu.memory_space<semaphore_mem>>) src(%26 : memref<64x8xf32, #tpu.memory_space<any>>) dst(%28 : memref<64x8xf32, #tpu.memory_space<vmem>>)
    %c2_i32_16 = arith.constant 2 : i32
    %c0_i32_17 = arith.constant 0 : i32
    %31 = tpu.memref_slice %arg4[%20, %c0_i32_17] : memref<64x8xf32, #tpu.memory_space<any>> -> memref<64x8xf32, #tpu.memory_space<any>>
    %c0_i32_18 = arith.constant 0 : i32
    %c16_i32 = arith.constant 16 : i32
    %32 = tpu.memref_slice %arg13[%11, %c0_i32_18, %c16_i32] : memref<2x64x56xf32, #tpu.memory_space<vmem>> -> memref<1x64x8xf32, #tpu.memory_space<vmem>>
    %33 = tpu.memref_squeeze %32 : memref<1x64x8xf32, #tpu.memory_space<vmem>> -> memref<64x8xf32, #tpu.memory_space<vmem>>
    %34 = tpu.memref_slice %arg14[%11, %c2_i32_16] : memref<2x6x!tpu.dma_semaphore, #tpu.memory_space<semaphore_mem>> -> memref<1x1x!tpu.dma_semaphore, #tpu.memory_space<semaphore_mem>>
    %35 = tpu.memref_squeeze %34 : memref<1x1x!tpu.dma_semaphore, #tpu.memory_space<semaphore_mem>> -> memref<!tpu.dma_semaphore, #tpu.memory_space<semaphore_mem>>
    tpu.wait_dma2 semaphore(%35 : memref<!tpu.dma_semaphore, #tpu.memory_space<semaphore_mem>>) src(%31 : memref<64x8xf32, #tpu.memory_space<any>>) dst(%33 : memref<64x8xf32, #tpu.memory_space<vmem>>)
    %c3_i32 = arith.constant 3 : i32
    %c0_i32_19 = arith.constant 0 : i32
    %36 = tpu.memref_slice %arg5[%20, %c0_i32_19] : memref<64x8xf32, #tpu.memory_space<any>> -> memref<64x8xf32, #tpu.memory_space<any>>
    %c0_i32_20 = arith.constant 0 : i32
    %c24_i32 = arith.constant 24 : i32
    %37 = tpu.memref_slice %arg13[%11, %c0_i32_20, %c24_i32] : memref<2x64x56xf32, #tpu.memory_space<vmem>> -> memref<1x64x8xf32, #tpu.memory_space<vmem>>
    %38 = tpu.memref_squeeze %37 : memref<1x64x8xf32, #tpu.memory_space<vmem>> -> memref<64x8xf32, #tpu.memory_space<vmem>>
    %39 = tpu.memref_slice %arg14[%11, %c3_i32] : memref<2x6x!tpu.dma_semaphore, #tpu.memory_space<semaphore_mem>> -> memref<1x1x!tpu.dma_semaphore, #tpu.memory_space<semaphore_mem>>
    %40 = tpu.memref_squeeze %39 : memref<1x1x!tpu.dma_semaphore, #tpu.memory_space<semaphore_mem>> -> memref<!tpu.dma_semaphore, #tpu.memory_space<semaphore_mem>>
    tpu.wait_dma2 semaphore(%40 : memref<!tpu.dma_semaphore, #tpu.memory_space<semaphore_mem>>) src(%36 : memref<64x8xf32, #tpu.memory_space<any>>) dst(%38 : memref<64x8xf32, #tpu.memory_space<vmem>>)
    %c4_i32 = arith.constant 4 : i32
    %c0_i32_21 = arith.constant 0 : i32
    %41 = tpu.memref_slice %arg6[%20, %c0_i32_21] : memref<64x8xf32, #tpu.memory_space<any>> -> memref<64x8xf32, #tpu.memory_space<any>>
    %c0_i32_22 = arith.constant 0 : i32
    %c32_i32 = arith.constant 32 : i32
    %42 = tpu.memref_slice %arg13[%11, %c0_i32_22, %c32_i32] : memref<2x64x56xf32, #tpu.memory_space<vmem>> -> memref<1x64x8xf32, #tpu.memory_space<vmem>>
    %43 = tpu.memref_squeeze %42 : memref<1x64x8xf32, #tpu.memory_space<vmem>> -> memref<64x8xf32, #tpu.memory_space<vmem>>
    %44 = tpu.memref_slice %arg14[%11, %c4_i32] : memref<2x6x!tpu.dma_semaphore, #tpu.memory_space<semaphore_mem>> -> memref<1x1x!tpu.dma_semaphore, #tpu.memory_space<semaphore_mem>>
    %45 = tpu.memref_squeeze %44 : memref<1x1x!tpu.dma_semaphore, #tpu.memory_space<semaphore_mem>> -> memref<!tpu.dma_semaphore, #tpu.memory_space<semaphore_mem>>
    tpu.wait_dma2 semaphore(%45 : memref<!tpu.dma_semaphore, #tpu.memory_space<semaphore_mem>>) src(%41 : memref<64x8xf32, #tpu.memory_space<any>>) dst(%43 : memref<64x8xf32, #tpu.memory_space<vmem>>)
    %c5_i32 = arith.constant 5 : i32
    %c0_i32_23 = arith.constant 0 : i32
    %46 = tpu.memref_slice %arg7[%20, %c0_i32_23] : memref<64x16xf32, #tpu.memory_space<any>> -> memref<64x16xf32, #tpu.memory_space<any>>
    %c0_i32_24 = arith.constant 0 : i32
    %c40_i32 = arith.constant 40 : i32
    %47 = tpu.memref_slice %arg13[%11, %c0_i32_24, %c40_i32] : memref<2x64x56xf32, #tpu.memory_space<vmem>> -> memref<1x64x16xf32, #tpu.memory_space<vmem>>
    %48 = tpu.memref_squeeze %47 : memref<1x64x16xf32, #tpu.memory_space<vmem>> -> memref<64x16xf32, #tpu.memory_space<vmem>>
    %49 = tpu.memref_slice %arg14[%11, %c5_i32] : memref<2x6x!tpu.dma_semaphore, #tpu.memory_space<semaphore_mem>> -> memref<1x1x!tpu.dma_semaphore, #tpu.memory_space<semaphore_mem>>
    %50 = tpu.memref_squeeze %49 : memref<1x1x!tpu.dma_semaphore, #tpu.memory_space<semaphore_mem>> -> memref<!tpu.dma_semaphore, #tpu.memory_space<semaphore_mem>>
    tpu.wait_dma2 semaphore(%50 : memref<!tpu.dma_semaphore, #tpu.memory_space<semaphore_mem>>) src(%46 : memref<64x16xf32, #tpu.memory_space<any>>) dst(%48 : memref<64x16xf32, #tpu.memory_space<vmem>>)
    %51 = arith.index_cast %11 : i32 to index
    %c0 = arith.constant 0 : index
    %c0_25 = arith.constant 0 : index
    %52 = vector.load %arg13[%51, %c0, %c0_25] : memref<2x64x56xf32, #tpu.memory_space<vmem>>, vector<1x64x56xf32>
    %53 = vector.shape_cast %52 : vector<1x64x56xf32> to vector<64x56xf32>
    %c0_26 = arith.constant 0 : index
    %c0_27 = arith.constant 0 : index
    %54 = vector.load %arg8[%c0_26, %c0_27] : memref<56x32xf32, #tpu.memory_space<vmem>>, vector<56x32xf32>
    %cst = arith.constant dense<0.000000e+00> : vector<64x32xf32>
    %55 = tpu.matmul %53, %54, %cst {dimension_numbers = #tpu.dot_dimension_numbers<[1], [0], [0], [1], [0, 0, 1, 1], [], []>} : vector<64x56xf32>, vector<56x32xf32>, vector<64x32xf32> -> vector<64x32xf32>
    %56 = vector.extract_strided_slice %53 {offsets = [0, 40], sizes = [64, 16], strides = [1, 1]} : vector<64x56xf32> to vector<64x16xf32>
    %c0_28 = arith.constant 0 : index
    %c0_29 = arith.constant 0 : index
    %57 = vector.load %arg9[%c0_28, %c0_29] : memref<1x32xf32, #tpu.memory_space<vmem>>, vector<1x32xf32>
    %c0_30 = arith.constant 0 : index
    %c0_31 = arith.constant 0 : index
    %58 = vector.load %arg10[%c0_30, %c0_31] : memref<1x32xf32, #tpu.memory_space<vmem>>, vector<1x32xf32>
    %c0_32 = arith.constant 0 : index
    %59 = memref.load %arg11[%c0_32] : memref<1xf32, #tpu.memory_space<smem>>
    %60 = vector.broadcast %57 : vector<1x32xf32> to vector<64x32xf32>
    %61 = arith.addf %55, %60 : vector<64x32xf32>
    %cst_33 = arith.constant 0.000000e+00 : f32
    %62 = vector.broadcast %cst_33 : f32 to vector<64x32xf32>
    %63 = arith.maximumf %61, %62 : vector<64x32xf32>
    %64 = vector.broadcast %58 : vector<1x32xf32> to vector<64x32xf32>
    %65 = arith.mulf %63, %64 : vector<64x32xf32>
    %cst_34 = arith.constant dense<0.000000e+00> : vector<64xf32>
    %66 = vector.multi_reduction <add>, %65, %cst_34 [1] : vector<64x32xf32> to vector<64xf32>
    %67 = vector.shape_cast %66 : vector<64xf32> to vector<64x1xf32>
    %68 = vector.broadcast %59 : f32 to vector<64x1xf32>
    %69 = arith.addf %67, %68 : vector<64x1xf32>
    %70 = arith.negf %69 : vector<64x1xf32>
    %71 = math.exp %70 : vector<64x1xf32>
    %cst_35 = arith.constant 1.000000e+00 : f32
    %72 = vector.broadcast %cst_35 : f32 to vector<64x1xf32>
    %73 = arith.addf %72, %71 : vector<64x1xf32>
    %74 = arith.divf %72, %73 : vector<64x1xf32>
    %75 = vector.broadcast %74 : vector<64x1xf32> to vector<64x16xf32>
    %76 = arith.mulf %56, %75 : vector<64x16xf32>
    %c0_36 = arith.constant 0 : index
    %c0_37 = arith.constant 0 : index
    %77 = vector.load %arg12[%c0_36, %c0_37] : memref<64x16xf32, #tpu.memory_space<vmem>>, vector<64x16xf32>
    tpu.vector_store %arg12[%c0_36, %c0_37], %76 {strides = array<i32>} : memref<64x16xf32, #tpu.memory_space<vmem>>, vector<64x16xf32>,
    return
  }
  func.func @transform_6(%arg0: i32, %arg1: i32) -> (i32, i32) {
    %c0_i32 = arith.constant 0 : i32
    %c0_i32_0 = arith.constant 0 : i32
    %c0_i32_1 = arith.constant 0 : i32
    return %c0_i32, %c0_i32_0 : i32, i32
  }
  func.func @transform_7(%arg0: i32, %arg1: i32) -> (i32, i32) {
    %c0_i32 = arith.constant 0 : i32
    %c0_i32_0 = arith.constant 0 : i32
    %c0_i32_1 = arith.constant 0 : i32
    return %c0_i32, %c0_i32_0 : i32, i32
  }
  func.func @transform_8(%arg0: i32, %arg1: i32) -> (i32, i32) {
    %c0_i32 = arith.constant 0 : i32
    %c0_i32_0 = arith.constant 0 : i32
    %c0_i32_1 = arith.constant 0 : i32
    return %c0_i32, %c0_i32_0 : i32, i32
  }
  func.func @transform_9(%arg0: i32, %arg1: i32) -> i32 {
    %c0_i32 = arith.constant 0 : i32
    %c0_i32_0 = arith.constant 0 : i32
    return %c0_i32 : i32
  }
  func.func @transform_10(%arg0: i32, %arg1: i32) -> (i32, i32) {
    %c1_i32 = arith.constant 1 : i32
    %0 = arith.muli %arg0, %c1_i32 : i32
    %1 = arith.addi %0, %arg1 : i32
    %c0_i32 = arith.constant 0 : i32
    %c0_i32_0 = arith.constant 0 : i32
    return %1, %c0_i32 : i32, i32
  }
}

module attributes {stable_mosaic.version = 11 : i64} {
  func.func @_splitk_kernel(%arg0: i32, %arg1: memref<64x8xf32, #tpu.memory_space<vmem>>, %arg2: memref<64x8xf32, #tpu.memory_space<vmem>>, %arg3: memref<64x8xf32, #tpu.memory_space<vmem>>, %arg4: memref<64x8xf32, #tpu.memory_space<vmem>>, %arg5: memref<64x8xf32, #tpu.memory_space<vmem>>, %arg6: memref<64x16xf32, #tpu.memory_space<vmem>>, %arg7: memref<56x32xf32, #tpu.memory_space<vmem>>, %arg8: memref<1x32xf32, #tpu.memory_space<vmem>>, %arg9: memref<1x32xf32, #tpu.memory_space<vmem>>, %arg10: memref<1xf32, #tpu.memory_space<smem>>, %arg11: memref<64x16xf32, #tpu.memory_space<vmem>>) attributes {dimension_semantics = [#tpu.dimension_semantics<parallel>], iteration_bounds = array<i64: 1>, scalar_prefetch = 0 : i64, scratch_operands = 0 : i64, tpu.core_type = #tpu.core_type<tc>, window_params = [{transform_indices = @transform_0, window_bounds = array<i64: 64, 8>}, {transform_indices = @transform_1, window_bounds = array<i64: 64, 8>}, {transform_indices = @transform_2, window_bounds = array<i64: 64, 8>}, {transform_indices = @transform_3, window_bounds = array<i64: 64, 8>}, {transform_indices = @transform_4, window_bounds = array<i64: 64, 8>}, {transform_indices = @transform_5, window_bounds = array<i64: 64, 16>}, {pipeline_mode = #tpu.pipeline_mode<synchronous>, transform_indices = @transform_6, window_bounds = array<i64: 56, 32>}, {pipeline_mode = #tpu.pipeline_mode<synchronous>, transform_indices = @transform_7, window_bounds = array<i64: 1, 32>}, {pipeline_mode = #tpu.pipeline_mode<synchronous>, transform_indices = @transform_8, window_bounds = array<i64: 1, 32>}, {transform_indices = @transform_9, window_bounds = array<i64: 1>}, {transform_indices = @transform_10, window_bounds = array<i64: 64, 16>}]} {
    %c0 = arith.constant 0 : index
    %c0_0 = arith.constant 0 : index
    %0 = vector.load %arg6[%c0, %c0_0] : memref<64x16xf32, #tpu.memory_space<vmem>>, vector<64x16xf32>
    %c0_1 = arith.constant 0 : index
    %c0_2 = arith.constant 0 : index
    %1 = vector.load %arg1[%c0_1, %c0_2] : memref<64x8xf32, #tpu.memory_space<vmem>>, vector<64x8xf32>
    %c0_3 = arith.constant 0 : index
    %c0_4 = arith.constant 0 : index
    %2 = vector.load %arg2[%c0_3, %c0_4] : memref<64x8xf32, #tpu.memory_space<vmem>>, vector<64x8xf32>
    %c0_5 = arith.constant 0 : index
    %c0_6 = arith.constant 0 : index
    %3 = vector.load %arg3[%c0_5, %c0_6] : memref<64x8xf32, #tpu.memory_space<vmem>>, vector<64x8xf32>
    %c0_7 = arith.constant 0 : index
    %c0_8 = arith.constant 0 : index
    %4 = vector.load %arg4[%c0_7, %c0_8] : memref<64x8xf32, #tpu.memory_space<vmem>>, vector<64x8xf32>
    %c0_9 = arith.constant 0 : index
    %c0_10 = arith.constant 0 : index
    %5 = vector.load %arg5[%c0_9, %c0_10] : memref<64x8xf32, #tpu.memory_space<vmem>>, vector<64x8xf32>
    %c0_11 = arith.constant 0 : index
    %c0_12 = arith.constant 0 : index
    %6 = vector.load %arg7[%c0_11, %c0_12] : memref<56x32xf32, #tpu.memory_space<vmem>>, vector<8x32xf32>
    %cst = arith.constant dense<0.000000e+00> : vector<64x32xf32>
    %7 = tpu.matmul %1, %6, %cst {dimension_numbers = #tpu.dot_dimension_numbers<[1], [0], [0], [1], [0, 0, 1, 1], [], []>} : vector<64x8xf32>, vector<8x32xf32>, vector<64x32xf32> -> vector<64x32xf32>
    %c8 = arith.constant 8 : index
    %c0_13 = arith.constant 0 : index
    %8 = vector.load %arg7[%c8, %c0_13] : memref<56x32xf32, #tpu.memory_space<vmem>>, vector<8x32xf32>
    %cst_14 = arith.constant dense<0.000000e+00> : vector<64x32xf32>
    %9 = tpu.matmul %2, %8, %cst_14 {dimension_numbers = #tpu.dot_dimension_numbers<[1], [0], [0], [1], [0, 0, 1, 1], [], []>} : vector<64x8xf32>, vector<8x32xf32>, vector<64x32xf32> -> vector<64x32xf32>
    %10 = arith.addf %7, %9 : vector<64x32xf32>
    %c16 = arith.constant 16 : index
    %c0_15 = arith.constant 0 : index
    %11 = vector.load %arg7[%c16, %c0_15] : memref<56x32xf32, #tpu.memory_space<vmem>>, vector<8x32xf32>
    %cst_16 = arith.constant dense<0.000000e+00> : vector<64x32xf32>
    %12 = tpu.matmul %3, %11, %cst_16 {dimension_numbers = #tpu.dot_dimension_numbers<[1], [0], [0], [1], [0, 0, 1, 1], [], []>} : vector<64x8xf32>, vector<8x32xf32>, vector<64x32xf32> -> vector<64x32xf32>
    %13 = arith.addf %10, %12 : vector<64x32xf32>
    %c24 = arith.constant 24 : index
    %c0_17 = arith.constant 0 : index
    %14 = vector.load %arg7[%c24, %c0_17] : memref<56x32xf32, #tpu.memory_space<vmem>>, vector<8x32xf32>
    %cst_18 = arith.constant dense<0.000000e+00> : vector<64x32xf32>
    %15 = tpu.matmul %4, %14, %cst_18 {dimension_numbers = #tpu.dot_dimension_numbers<[1], [0], [0], [1], [0, 0, 1, 1], [], []>} : vector<64x8xf32>, vector<8x32xf32>, vector<64x32xf32> -> vector<64x32xf32>
    %16 = arith.addf %13, %15 : vector<64x32xf32>
    %c32 = arith.constant 32 : index
    %c0_19 = arith.constant 0 : index
    %17 = vector.load %arg7[%c32, %c0_19] : memref<56x32xf32, #tpu.memory_space<vmem>>, vector<8x32xf32>
    %cst_20 = arith.constant dense<0.000000e+00> : vector<64x32xf32>
    %18 = tpu.matmul %5, %17, %cst_20 {dimension_numbers = #tpu.dot_dimension_numbers<[1], [0], [0], [1], [0, 0, 1, 1], [], []>} : vector<64x8xf32>, vector<8x32xf32>, vector<64x32xf32> -> vector<64x32xf32>
    %19 = arith.addf %16, %18 : vector<64x32xf32>
    %c40 = arith.constant 40 : index
    %c0_21 = arith.constant 0 : index
    %20 = vector.load %arg7[%c40, %c0_21] : memref<56x32xf32, #tpu.memory_space<vmem>>, vector<16x32xf32>
    %cst_22 = arith.constant dense<0.000000e+00> : vector<64x32xf32>
    %21 = tpu.matmul %0, %20, %cst_22 {dimension_numbers = #tpu.dot_dimension_numbers<[1], [0], [0], [1], [0, 0, 1, 1], [], []>} : vector<64x16xf32>, vector<16x32xf32>, vector<64x32xf32> -> vector<64x32xf32>
    %22 = arith.addf %19, %21 : vector<64x32xf32>
    %c0_23 = arith.constant 0 : index
    %c0_24 = arith.constant 0 : index
    %23 = vector.load %arg8[%c0_23, %c0_24] : memref<1x32xf32, #tpu.memory_space<vmem>>, vector<1x32xf32>
    %c0_25 = arith.constant 0 : index
    %c0_26 = arith.constant 0 : index
    %24 = vector.load %arg9[%c0_25, %c0_26] : memref<1x32xf32, #tpu.memory_space<vmem>>, vector<1x32xf32>
    %c0_27 = arith.constant 0 : index
    %25 = memref.load %arg10[%c0_27] : memref<1xf32, #tpu.memory_space<smem>>
    %26 = vector.broadcast %23 : vector<1x32xf32> to vector<64x32xf32>
    %27 = arith.addf %22, %26 : vector<64x32xf32>
    %cst_28 = arith.constant 0.000000e+00 : f32
    %28 = vector.broadcast %cst_28 : f32 to vector<64x32xf32>
    %29 = arith.maximumf %27, %28 : vector<64x32xf32>
    %30 = vector.broadcast %24 : vector<1x32xf32> to vector<64x32xf32>
    %31 = arith.mulf %29, %30 : vector<64x32xf32>
    %cst_29 = arith.constant dense<0.000000e+00> : vector<64xf32>
    %32 = vector.multi_reduction <add>, %31, %cst_29 [1] : vector<64x32xf32> to vector<64xf32>
    %33 = vector.shape_cast %32 : vector<64xf32> to vector<64x1xf32>
    %34 = vector.broadcast %25 : f32 to vector<64x1xf32>
    %35 = arith.addf %33, %34 : vector<64x1xf32>
    %36 = arith.negf %35 : vector<64x1xf32>
    %37 = math.exp %36 : vector<64x1xf32>
    %cst_30 = arith.constant 1.000000e+00 : f32
    %38 = vector.broadcast %cst_30 : f32 to vector<64x1xf32>
    %39 = arith.addf %38, %37 : vector<64x1xf32>
    %40 = arith.divf %38, %39 : vector<64x1xf32>
    %41 = vector.broadcast %40 : vector<64x1xf32> to vector<64x16xf32>
    %42 = arith.mulf %0, %41 : vector<64x16xf32>
    %c0_31 = arith.constant 0 : index
    %c0_32 = arith.constant 0 : index
    %43 = vector.load %arg11[%c0_31, %c0_32] : memref<64x16xf32, #tpu.memory_space<vmem>>, vector<64x16xf32>
    tpu.vector_store %arg11[%c0_31, %c0_32], %42 {strides = array<i32>} : memref<64x16xf32, #tpu.memory_space<vmem>>, vector<64x16xf32>,
    return
  }
  func.func @transform_0(%arg0: i32) -> (i32, i32) {
    %c0_i32 = arith.constant 0 : i32
    %c0_i32_0 = arith.constant 0 : i32
    return %arg0, %c0_i32 : i32, i32
  }
  func.func @transform_1(%arg0: i32) -> (i32, i32) {
    %c0_i32 = arith.constant 0 : i32
    %c0_i32_0 = arith.constant 0 : i32
    return %arg0, %c0_i32 : i32, i32
  }
  func.func @transform_2(%arg0: i32) -> (i32, i32) {
    %c0_i32 = arith.constant 0 : i32
    %c0_i32_0 = arith.constant 0 : i32
    return %arg0, %c0_i32 : i32, i32
  }
  func.func @transform_3(%arg0: i32) -> (i32, i32) {
    %c0_i32 = arith.constant 0 : i32
    %c0_i32_0 = arith.constant 0 : i32
    return %arg0, %c0_i32 : i32, i32
  }
  func.func @transform_4(%arg0: i32) -> (i32, i32) {
    %c0_i32 = arith.constant 0 : i32
    %c0_i32_0 = arith.constant 0 : i32
    return %arg0, %c0_i32 : i32, i32
  }
  func.func @transform_5(%arg0: i32) -> (i32, i32) {
    %c0_i32 = arith.constant 0 : i32
    %c0_i32_0 = arith.constant 0 : i32
    return %arg0, %c0_i32 : i32, i32
  }
  func.func @transform_6(%arg0: i32) -> (i32, i32) {
    %c0_i32 = arith.constant 0 : i32
    %c0_i32_0 = arith.constant 0 : i32
    %c0_i32_1 = arith.constant 0 : i32
    return %c0_i32, %c0_i32_0 : i32, i32
  }
  func.func @transform_7(%arg0: i32) -> (i32, i32) {
    %c0_i32 = arith.constant 0 : i32
    %c0_i32_0 = arith.constant 0 : i32
    %c0_i32_1 = arith.constant 0 : i32
    return %c0_i32, %c0_i32_0 : i32, i32
  }
  func.func @transform_8(%arg0: i32) -> (i32, i32) {
    %c0_i32 = arith.constant 0 : i32
    %c0_i32_0 = arith.constant 0 : i32
    %c0_i32_1 = arith.constant 0 : i32
    return %c0_i32, %c0_i32_0 : i32, i32
  }
  func.func @transform_9(%arg0: i32) -> i32 {
    %c0_i32 = arith.constant 0 : i32
    %c0_i32_0 = arith.constant 0 : i32
    return %c0_i32 : i32
  }
  func.func @transform_10(%arg0: i32) -> (i32, i32) {
    %c0_i32 = arith.constant 0 : i32
    %c0_i32_0 = arith.constant 0 : i32
    return %arg0, %c0_i32 : i32, i32
  }
}

</mosaic_0001>

<llo_original>
// kernel: tpu_custom_call.1
$region0: #{tpu_custom_call.1}
  #allocation0 [shape = 'u32[]', space=smem, size = 0x4, offset = 0x4, fixed_abs, tag = 'smem constant byte address 0x4 - core index']
  #allocation1 [shape = 'u32[72,128]{1,0:T(1,128)}', space=vmem, size = 0x9000, scoped, tag = 'internal scratch']
  #allocation2 [shape = 'f32[1]{0:T(128)S(6)}', space=smem, size = 0x200, scoped, tag = 'scoped memory for tpu_custom_call.1']
  %s0 = inlined_call_operand.vmem [shape: f32[64,8], index: 0, kind: input, shape index: {}]
  %s1 = inlined_call_operand.vmem [shape: f32[64,8], index: 1, kind: input, shape index: {}]
  %s2 = inlined_call_operand.vmem [shape: f32[64,8], index: 2, kind: input, shape index: {}]
  %s3 = inlined_call_operand.vmem [shape: f32[64,8], index: 3, kind: input, shape index: {}]
  %s4 = inlined_call_operand.vmem [shape: f32[64,8], index: 4, kind: input, shape index: {}]
  %s5 = inlined_call_operand.vmem [shape: f32[64,16], index: 5, kind: input, shape index: {}]
  %s6 = inlined_call_operand.vmem [shape: f32[56,32], index: 6, kind: input, shape index: {}]
  %s7 = inlined_call_operand.vmem [shape: f32[1,32], index: 7, kind: input, shape index: {}]
  %s8 = inlined_call_operand.vmem [shape: f32[1,32], index: 8, kind: input, shape index: {}]
  %s9 = inlined_call_operand.<no memory space> [shape: f32[1], index: 9, kind: input, shape index: {}]
  %s10 = inlined_call_operand.vmem [shape: f32[64,16], index: 10, kind: output, shape index: {}]
  %s11 = sld [smem:[#allocation0]]
  $region50: #{tpu_custom_call.1} parent=0
    _
  %s13 = ssub.s32 1, %s11
  %s14 = scalar_select 0, %s13, %s11
  %15 = sst [smem:[#allocation2]] %s9
  // Predicated region
  $region2: #{tpu_custom_call.1} parent=0 // pred_check
    _
  $region3: #{tpu_custom_call.1} parent=0 // pred_check_branch
    %17 = sbr.rel (0) target = $region5
  $region4: #{tpu_custom_call.1} parent=0 // pred_region
    _
  $region5: #{tpu_custom_call.1} parent=0 // pred_fallthru
    _
  // Predicated region
  $region6: #{tpu_custom_call.1} parent=0 // pred_check
    _
  $region7: #{tpu_custom_call.1} parent=0 // pred_check_branch
    %19 = sbr.rel (0) target = $region9
  $region8: #{tpu_custom_call.1} parent=0 // pred_region
    _
  $region9: #{tpu_custom_call.1} parent=0 // pred_fallthru
    _
  // Predicated region
  $region10: #{tpu_custom_call.1} parent=0 // pred_check
    _
  $region11: #{tpu_custom_call.1} parent=0 // pred_check_branch
    %21 = sbr.rel (0) target = $region13
  $region12: #{tpu_custom_call.1} parent=0 // pred_region
    _
  $region13: #{tpu_custom_call.1} parent=0 // pred_fallthru
    _
  // Predicated region
  $region14: #{tpu_custom_call.1} parent=0 // pred_check
    _
  $region15: #{tpu_custom_call.1} parent=0 // pred_check_branch
    %23 = sbr.rel (0) target = $region17
  $region16: #{tpu_custom_call.1} parent=0 // pred_region
    _
  $region17: #{tpu_custom_call.1} parent=0 // pred_fallthru
    _
  // Predicated region
  $region18: #{tpu_custom_call.1} parent=0 // pred_check
    _
  $region19: #{tpu_custom_call.1} parent=0 // pred_check_branch
    %25 = sbr.rel (0) target = $region21
  $region20: #{tpu_custom_call.1} parent=0 // pred_region
    _
  $region21: #{tpu_custom_call.1} parent=0 // pred_fallthru
    _
  // Predicated region
  $region22: #{tpu_custom_call.1} parent=0 // pred_check
    _
  $region23: #{tpu_custom_call.1} parent=0 // pred_check_branch
    %27 = sbr.rel (0) target = $region25
  $region24: #{tpu_custom_call.1} parent=0 // pred_region
    _
  $region25: #{tpu_custom_call.1} parent=0 // pred_fallthru
    _
  // Predicated region
  $region26: #{tpu_custom_call.1} parent=0 // pred_check
    _
  $region27: #{tpu_custom_call.1} parent=0 // pred_check_branch
    %29 = sbr.rel (0) target = $region29
  $region28: #{tpu_custom_call.1} parent=0 // pred_region
    _
  $region29: #{tpu_custom_call.1} parent=0 // pred_fallthru
    _
  // Predicated region
  $region30: #{tpu_custom_call.1} parent=0 // pred_check
    _
  $region31: #{tpu_custom_call.1} parent=0 // pred_check_branch
    %31 = sbr.rel (0) target = $region33
  $region32: #{tpu_custom_call.1} parent=0 // pred_region
    _
  $region33: #{tpu_custom_call.1} parent=0 // pred_fallthru
    _
  // Predicated region
  $region34: #{tpu_custom_call.1} parent=0 // pred_check
    _
  $region35: #{tpu_custom_call.1} parent=0 // pred_check_branch
    %33 = sbr.rel (0) target = $region37
  $region36: #{tpu_custom_call.1} parent=0 // pred_region
    _
  $region37: #{tpu_custom_call.1} parent=0 // pred_fallthru
    _
  // Predicated region
  $region38: #{tpu_custom_call.1} parent=0 // pred_check
    _
  $region39: #{tpu_custom_call.1} parent=0 // pred_check_branch
    %35 = sbr.rel (0) target = $region41
  $region40: #{tpu_custom_call.1} parent=0 // pred_region
    _
  $region41: #{tpu_custom_call.1} parent=0 // pred_fallthru
    _
  %v36 = vld [vmem:[%s5] sm:$0xff]
  %v37 = vld [vmem:[%s5 + $0x8] sm:$0xff]
  %v38 = vld [vmem:[%s5 + $0x10] sm:$0xff]
  %v39 = vld [vmem:[%s5 + $0x18] sm:$0xff]
  %v40 = vld [vmem:[%s5 + $0x20] sm:$0xff]
  %v41 = vld [vmem:[%s5 + $0x28] sm:$0xff]
  %v42 = vld [vmem:[%s5 + $0x30] sm:$0xff]
  %v43 = vld [vmem:[%s5 + $0x38] sm:$0xff]
  %v44 = vld [vmem:[%s0] sm:$0xff]
  %v45 = vld [vmem:[%s0 + $0x8] sm:$0xff]
  %v46 = vld [vmem:[%s0 + $0x10] sm:$0xff]
  %v47 = vld [vmem:[%s0 + $0x18] sm:$0xff]
  %v48 = vld [vmem:[%s0 + $0x20] sm:$0xff]
  %v49 = vld [vmem:[%s0 + $0x28] sm:$0xff]
  %v50 = vld [vmem:[%s0 + $0x30] sm:$0xff]
  %v51 = vld [vmem:[%s0 + $0x38] sm:$0xff]
  %v52 = vld [vmem:[%s1] sm:$0xff]
  %v53 = vld [vmem:[%s1 + $0x8] sm:$0xff]
  %v54 = vld [vmem:[%s1 + $0x10] sm:$0xff]
  %v55 = vld [vmem:[%s1 + $0x18] sm:$0xff]
  %v56 = vld [vmem:[%s1 + $0x20] sm:$0xff]
  %v57 = vld [vmem:[%s1 + $0x28] sm:$0xff]
  %v58 = vld [vmem:[%s1 + $0x30] sm:$0xff]
  %v59 = vld [vmem:[%s1 + $0x38] sm:$0xff]
  %v60 = vld [vmem:[%s2] sm:$0xff]
  %v61 = vld [vmem:[%s2 + $0x8] sm:$0xff]
  %v62 = vld [vmem:[%s2 + $0x10] sm:$0xff]
  %v63 = vld [vmem:[%s2 + $0x18] sm:$0xff]
  %v64 = vld [vmem:[%s2 + $0x20] sm:$0xff]
  %v65 = vld [vmem:[%s2 + $0x28] sm:$0xff]
  %v66 = vld [vmem:[%s2 + $0x30] sm:$0xff]
  %v67 = vld [vmem:[%s2 + $0x38] sm:$0xff]
  %v68 = vld [vmem:[%s3] sm:$0xff]
  %v69 = vld [vmem:[%s3 + $0x8] sm:$0xff]
  %v70 = vld [vmem:[%s3 + $0x10] sm:$0xff]
  %v71 = vld [vmem:[%s3 + $0x18] sm:$0xff]
  %v72 = vld [vmem:[%s3 + $0x20] sm:$0xff]
  %v73 = vld [vmem:[%s3 + $0x28] sm:$0xff]
  %v74 = vld [vmem:[%s3 + $0x30] sm:$0xff]
  %v75 = vld [vmem:[%s3 + $0x38] sm:$0xff]
  %v76 = vld [vmem:[%s4] sm:$0xff]
  %v77 = vld [vmem:[%s4 + $0x8] sm:$0xff]
  %v78 = vld [vmem:[%s4 + $0x10] sm:$0xff]
  %v79 = vld [vmem:[%s4 + $0x18] sm:$0xff]
  %v80 = vld [vmem:[%s4 + $0x20] sm:$0xff]
  %v81 = vld [vmem:[%s4 + $0x28] sm:$0xff]
  %v82 = vld [vmem:[%s4 + $0x30] sm:$0xff]
  %v83 = vld [vmem:[%s4 + $0x38] sm:$0xff]
  %v84 = vld [vmem:[%s6] sm:$0xff]
  %v85 = vld [vmem:[%s6 + $0x8] sm:$0xff]
  %vm86 = vcmask 64512
  %v88 = vsel %vm86, %v52, 0
  %v91 = vsel %vm86, %v53, 0
  %v94 = vsel %vm86, %v54, 0
  %v97 = vsel %vm86, %v55, 0
  %v100 = vsel %vm86, %v56, 0
  %v103 = vsel %vm86, %v57, 0
  %v106 = vsel %vm86, %v58, 0
  %v109 = vsel %vm86, %v59, 0
  %111 = vmatpush.msra.mxu0 0.0
  %112 = vmatpush.msra.mxu0 0.0
  %113 = vmatpush.msra.mxu0 0.0
  %114 = vmatpush.msra.mxu0 0.0
  %115 = vmatpush.msra.mxu0 0.0
  %116 = vmatpush.msra.mxu0 0.0
  %117 = vmatpush.msra.mxu0 0.0
  %118 = vmatpush.msra.mxu0 0.0
  %119 = vmatpush.msra.mxu0 0.0
  %120 = vmatpush.msra.mxu0 0.0
  %121 = vmatpush.msra.mxu0 0.0
  %122 = vmatpush.msra.mxu0 0.0
  %123 = vmatpush.msra.mxu0 0.0
  %124 = vmatpush.msra.mxu0 0.0
  %125 = vmatpush.msra.mxu0 0.0
  %126 = vmatpush.msra.mxu0 %v85
  %127 = vmatmul.f32.gmra.mxu0 %v88
  %v128 = vpop.f32.mrf.mxu0
  %v129 = vadd.f32 0.0, %v128
  %130 = vmatmul.f32.gmra.mxu0 %v91
  %v131 = vpop.f32.mrf.mxu0
  %v132 = vadd.f32 0.0, %v131
  %133 = vmatmul.f32.gmra.mxu0 %v94
  %v134 = vpop.f32.mrf.mxu0
  %v135 = vadd.f32 0.0, %v134
  %136 = vmatmul.f32.gmra.mxu0 %v97
  %v137 = vpop.f32.mrf.mxu0
  %v138 = vadd.f32 0.0, %v137
  %139 = vmatmul.f32.gmra.mxu0 %v100
  %v140 = vpop.f32.mrf.mxu0
  %v141 = vadd.f32 0.0, %v140
  %142 = vmatmul.f32.gmra.mxu0 %v103
  %v143 = vpop.f32.mrf.mxu0
  %v144 = vadd.f32 0.0, %v143
  %145 = vmatmul.f32.gmra.mxu0 %v106
  %v146 = vpop.f32.mrf.mxu0
  %v147 = vadd.f32 0.0, %v146
  %148 = vmatmul.f32.gmra.mxu0 %v109
  %v149 = vpop.f32.mrf.mxu0
  %v150 = vadd.f32 0.0, %v149
  %151 = vdwg.mxu0
  %v153 = vsel %vm86, %v44, 0
  %v156 = vsel %vm86, %v45, 0
  %v159 = vsel %vm86, %v46, 0
  %v162 = vsel %vm86, %v47, 0
  %v165 = vsel %vm86, %v48, 0
  %v168 = vsel %vm86, %v49, 0
  %v171 = vsel %vm86, %v50, 0
  %v174 = vsel %vm86, %v51, 0
  %176 = vmatpush.msra.mxu0 0.0
  %177 = vmatpush.msra.mxu0 0.0
  %178 = vmatpush.msra.mxu0 0.0
  %179 = vmatpush.msra.mxu0 0.0
  %180 = vmatpush.msra.mxu0 0.0
  %181 = vmatpush.msra.mxu0 0.0
  %182 = vmatpush.msra.mxu0 0.0
  %183 = vmatpush.msra.mxu0 0.0
  %184 = vmatpush.msra.mxu0 0.0
  %185 = vmatpush.msra.mxu0 0.0
  %186 = vmatpush.msra.mxu0 0.0
  %187 = vmatpush.msra.mxu0 0.0
  %188 = vmatpush.msra.mxu0 0.0
  %189 = vmatpush.msra.mxu0 0.0
  %190 = vmatpush.msra.mxu0 0.0
  %191 = vmatpush.msra.mxu0 %v84
  %192 = vmatmul.f32.gmra.mxu0 %v153
  %v193 = vpop.f32.mrf.mxu0
  %v194 = vadd.f32 %v129, %v193
  %195 = vmatmul.f32.gmra.mxu0 %v156
  %v196 = vpop.f32.mrf.mxu0
  %v197 = vadd.f32 %v132, %v196
  %198 = vmatmul.f32.gmra.mxu0 %v159
  %v199 = vpop.f32.mrf.mxu0
  %v200 = vadd.f32 %v135, %v199
  %201 = vmatmul.f32.gmra.mxu0 %v162
  %v202 = vpop.f32.mrf.mxu0
  %v203 = vadd.f32 %v138, %v202
  %204 = vmatmul.f32.gmra.mxu0 %v165
  %v205 = vpop.f32.mrf.mxu0
  %v206 = vadd.f32 %v141, %v205
  %207 = vmatmul.f32.gmra.mxu0 %v168
  %v208 = vpop.f32.mrf.mxu0
  %v209 = vadd.f32 %v144, %v208
  %210 = vmatmul.f32.gmra.mxu0 %v171
  %v211 = vpop.f32.mrf.mxu0
  %v212 = vadd.f32 %v147, %v211
  %213 = vmatmul.f32.gmra.mxu0 %v174
  %v214 = vpop.f32.mrf.mxu0
  %v215 = vadd.f32 %v150, %v214
  %216 = vdwg.mxu0
  %v217 = vld [vmem:[%s6 + $0x10] sm:$0xff]
  %v219 = vsel %vm86, %v60, 0
  %v222 = vsel %vm86, %v61, 0
  %v225 = vsel %vm86, %v62, 0
  %v228 = vsel %vm86, %v63, 0
  %v231 = vsel %vm86, %v64, 0
  %v234 = vsel %vm86, %v65, 0
  %v237 = vsel %vm86, %v66, 0
  %v240 = vsel %vm86, %v67, 0
  %242 = vmatpush.msra.mxu0 0.0
  %243 = vmatpush.msra.mxu0 0.0
  %244 = vmatpush.msra.mxu0 0.0
  %245 = vmatpush.msra.mxu0 0.0
  %246 = vmatpush.msra.mxu0 0.0
  %247 = vmatpush.msra.mxu0 0.0
  %248 = vmatpush.msra.mxu0 0.0
  %249 = vmatpush.msra.mxu0 0.0
  %250 = vmatpush.msra.mxu0 0.0
  %251 = vmatpush.msra.mxu0 0.0
  %252 = vmatpush.msra.mxu0 0.0
  %253 = vmatpush.msra.mxu0 0.0
  %254 = vmatpush.msra.mxu0 0.0
  %255 = vmatpush.msra.mxu0 0.0
  %256 = vmatpush.msra.mxu0 0.0
  %257 = vmatpush.msra.mxu0 %v217
  %258 = vmatmul.f32.gmra.mxu0 %v219
  %v259 = vpop.f32.mrf.mxu0
  %v260 = vadd.f32 0.0, %v259
  %261 = vmatmul.f32.gmra.mxu0 %v222
  %v262 = vpop.f32.mrf.mxu0
  %v263 = vadd.f32 0.0, %v262
  %264 = vmatmul.f32.gmra.mxu0 %v225
  %v265 = vpop.f32.mrf.mxu0
  %v266 = vadd.f32 0.0, %v265
  %267 = vmatmul.f32.gmra.mxu0 %v228
  %v268 = vpop.f32.mrf.mxu0
  %v269 = vadd.f32 0.0, %v268
  %270 = vmatmul.f32.gmra.mxu0 %v231
  %v271 = vpop.f32.mrf.mxu0
  %v272 = vadd.f32 0.0, %v271
  %273 = vmatmul.f32.gmra.mxu0 %v234
  %v274 = vpop.f32.mrf.mxu0
  %v275 = vadd.f32 0.0, %v274
  %276 = vmatmul.f32.gmra.mxu0 %v237
  %v277 = vpop.f32.mrf.mxu0
  %v278 = vadd.f32 0.0, %v277
  %279 = vmatmul.f32.gmra.mxu0 %v240
  %v280 = vpop.f32.mrf.mxu0
  %v281 = vadd.f32 0.0, %v280
  %282 = vdwg.mxu0
  %v283 = vadd.f32 %v194, %v260
  %v284 = vadd.f32 %v197, %v263
  %v285 = vadd.f32 %v200, %v266
  %v286 = vadd.f32 %v203, %v269
  %v287 = vadd.f32 %v206, %v272
  %v288 = vadd.f32 %v209, %v275
  %v289 = vadd.f32 %v212, %v278
  %v290 = vadd.f32 %v215, %v281
  %v291 = vld [vmem:[%s6 + $0x18] sm:$0xff]
  %v293 = vsel %vm86, %v68, 0
  %v296 = vsel %vm86, %v69, 0
  %v299 = vsel %vm86, %v70, 0
  %v302 = vsel %vm86, %v71, 0
  %v305 = vsel %vm86, %v72, 0
  %v308 = vsel %vm86, %v73, 0
  %v311 = vsel %vm86, %v74, 0
  %v314 = vsel %vm86, %v75, 0
  %316 = vmatpush.msra.mxu0 0.0
  %317 = vmatpush.msra.mxu0 0.0
  %318 = vmatpush.msra.mxu0 0.0
  %319 = vmatpush.msra.mxu0 0.0
  %320 = vmatpush.msra.mxu0 0.0
  %321 = vmatpush.msra.mxu0 0.0
  %322 = vmatpush.msra.mxu0 0.0
  %323 = vmatpush.msra.mxu0 0.0
  %324 = vmatpush.msra.mxu0 0.0
  %325 = vmatpush.msra.mxu0 0.0
  %326 = vmatpush.msra.mxu0 0.0
  %327 = vmatpush.msra.mxu0 0.0
  %328 = vmatpush.msra.mxu0 0.0
  %329 = vmatpush.msra.mxu0 0.0
  %330 = vmatpush.msra.mxu0 0.0
  %331 = vmatpush.msra.mxu0 %v291
  %332 = vmatmul.f32.gmra.mxu0 %v293
  %v333 = vpop.f32.mrf.mxu0
  %v334 = vadd.f32 0.0, %v333
  %335 = vmatmul.f32.gmra.mxu0 %v296
  %v336 = vpop.f32.mrf.mxu0
  %v337 = vadd.f32 0.0, %v336
  %338 = vmatmul.f32.gmra.mxu0 %v299
  %v339 = vpop.f32.mrf.mxu0
  %v340 = vadd.f32 0.0, %v339
  %341 = vmatmul.f32.gmra.mxu0 %v302
  %v342 = vpop.f32.mrf.mxu0
  %v343 = vadd.f32 0.0, %v342
  %344 = vmatmul.f32.gmra.mxu0 %v305
  %v345 = vpop.f32.mrf.mxu0
  %v346 = vadd.f32 0.0, %v345
  %347 = vmatmul.f32.gmra.mxu0 %v308
  %v348 = vpop.f32.mrf.mxu0
  %v349 = vadd.f32 0.0, %v348
  %350 = vmatmul.f32.gmra.mxu0 %v311
  %v351 = vpop.f32.mrf.mxu0
  %v352 = vadd.f32 0.0, %v351
  %353 = vmatmul.f32.gmra.mxu0 %v314
  %v354 = vpop.f32.mrf.mxu0
  %v355 = vadd.f32 0.0, %v354
  %356 = vdwg.mxu0
  %v357 = vadd.f32 %v283, %v334
  %v358 = vadd.f32 %v284, %v337
  %v359 = vadd.f32 %v285, %v340
  %v360 = vadd.f32 %v286, %v343
  %v361 = vadd.f32 %v287, %v346
  %v362 = vadd.f32 %v288, %v349
  %v363 = vadd.f32 %v289, %v352
  %v364 = vadd.f32 %v290, %v355
  %v365 = vld [vmem:[%s6 + $0x20] sm:$0xff]
  %v367 = vsel %vm86, %v76, 0
  %v370 = vsel %vm86, %v77, 0
  %v373 = vsel %vm86, %v78, 0
  %v376 = vsel %vm86, %v79, 0
  %v379 = vsel %vm86, %v80, 0
  %v382 = vsel %vm86, %v81, 0
  %v385 = vsel %vm86, %v82, 0
  %v388 = vsel %vm86, %v83, 0
  %390 = vmatpush.msra.mxu0 0.0
  %391 = vmatpush.msra.mxu0 0.0
  %392 = vmatpush.msra.mxu0 0.0
  %393 = vmatpush.msra.mxu0 0.0
  %394 = vmatpush.msra.mxu0 0.0
  %395 = vmatpush.msra.mxu0 0.0
  %396 = vmatpush.msra.mxu0 0.0
  %397 = vmatpush.msra.mxu0 0.0
  %398 = vmatpush.msra.mxu0 0.0
  %399 = vmatpush.msra.mxu0 0.0
  %400 = vmatpush.msra.mxu0 0.0
  %401 = vmatpush.msra.mxu0 0.0
  %402 = vmatpush.msra.mxu0 0.0
  %403 = vmatpush.msra.mxu0 0.0
  %404 = vmatpush.msra.mxu0 0.0
  %405 = vmatpush.msra.mxu0 %v365
  %406 = vmatmul.f32.gmra.mxu0 %v367
  %v407 = vpop.f32.mrf.mxu0
  %v408 = vadd.f32 0.0, %v407
  %409 = vmatmul.f32.gmra.mxu0 %v370
  %v410 = vpop.f32.mrf.mxu0
  %v411 = vadd.f32 0.0, %v410
  %412 = vmatmul.f32.gmra.mxu0 %v373
  %v413 = vpop.f32.mrf.mxu0
  %v414 = vadd.f32 0.0, %v413
  %415 = vmatmul.f32.gmra.mxu0 %v376
  %v416 = vpop.f32.mrf.mxu0
  %v417 = vadd.f32 0.0, %v416
  %418 = vmatmul.f32.gmra.mxu0 %v379
  %v419 = vpop.f32.mrf.mxu0
  %v420 = vadd.f32 0.0, %v419
  %421 = vmatmul.f32.gmra.mxu0 %v382
  %v422 = vpop.f32.mrf.mxu0
  %v423 = vadd.f32 0.0, %v422
  %424 = vmatmul.f32.gmra.mxu0 %v385
  %v425 = vpop.f32.mrf.mxu0
  %v426 = vadd.f32 0.0, %v425
  %427 = vmatmul.f32.gmra.mxu0 %v388
  %v428 = vpop.f32.mrf.mxu0
  %v429 = vadd.f32 0.0, %v428
  %430 = vdwg.mxu0
  %v431 = vadd.f32 %v357, %v408
  %v432 = vadd.f32 %v358, %v411
  %v433 = vadd.f32 %v359, %v414
  %v434 = vadd.f32 %v360, %v417
  %v435 = vadd.f32 %v361, %v420
  %v436 = vadd.f32 %v362, %v423
  %v437 = vadd.f32 %v363, %v426
  %v438 = vadd.f32 %v364, %v429
  %v439 = vld [vmem:[%s6 + $0x28] sm:$0xff]
  %v440 = vld [vmem:[%s6 + $0x30] sm:$0xff]
  %vm441 = vcmask 130048
  %v443 = vsel %vm441, %v36, 0
  %v446 = vsel %vm441, %v37, 0
  %v449 = vsel %vm441, %v38, 0
  %v452 = vsel %vm441, %v39, 0
  %v455 = vsel %vm441, %v40, 0
  %v458 = vsel %vm441, %v41, 0
  %v461 = vsel %vm441, %v42, 0
  %v464 = vsel %vm441, %v43, 0
  %466 = vmatpush.msra.mxu0 0.0
  %467 = vmatpush.msra.mxu0 0.0
  %468 = vmatpush.msra.mxu0 0.0
  %469 = vmatpush.msra.mxu0 0.0
  %470 = vmatpush.msra.mxu0 0.0
  %471 = vmatpush.msra.mxu0 0.0
  %472 = vmatpush.msra.mxu0 0.0
  %473 = vmatpush.msra.mxu0 0.0
  %474 = vmatpush.msra.mxu0 0.0
  %475 = vmatpush.msra.mxu0 0.0
  %476 = vmatpush.msra.mxu0 0.0
  %477 = vmatpush.msra.mxu0 0.0
  %478 = vmatpush.msra.mxu0 0.0
  %479 = vmatpush.msra.mxu0 0.0
  %480 = vmatpush.msra.mxu0 %v440
  %481 = vmatpush.msra.mxu0 %v439
  %482 = vmatmul.f32.gmra.mxu0 %v443
  %v483 = vpop.f32.mrf.mxu0
  %v484 = vadd.f32 0.0, %v483
  %485 = vmatmul.f32.gmra.mxu0 %v446
  %v486 = vpop.f32.mrf.mxu0
  %v487 = vadd.f32 0.0, %v486
  %488 = vmatmul.f32.gmra.mxu0 %v449
  %v489 = vpop.f32.mrf.mxu0
  %v490 = vadd.f32 0.0, %v489
  %491 = vmatmul.f32.gmra.mxu0 %v452
  %v492 = vpop.f32.mrf.mxu0
  %v493 = vadd.f32 0.0, %v492
  %494 = vmatmul.f32.gmra.mxu0 %v455
  %v495 = vpop.f32.mrf.mxu0
  %v496 = vadd.f32 0.0, %v495
  %497 = vmatmul.f32.gmra.mxu0 %v458
  %v498 = vpop.f32.mrf.mxu0
  %v499 = vadd.f32 0.0, %v498
  %500 = vmatmul.f32.gmra.mxu0 %v461
  %v501 = vpop.f32.mrf.mxu0
  %v502 = vadd.f32 0.0, %v501
  %503 = vmatmul.f32.gmra.mxu0 %v464
  %v504 = vpop.f32.mrf.mxu0
  %v505 = vadd.f32 0.0, %v504
  %506 = vdwg.mxu0
  %v507 = vadd.f32 %v431, %v484
  %v508 = vadd.f32 %v432, %v487
  %v509 = vadd.f32 %v433, %v490
  %v510 = vadd.f32 %v434, %v493
  %v511 = vadd.f32 %v435, %v496
  %v512 = vadd.f32 %v436, %v499
  %v513 = vadd.f32 %v437, %v502
  %v514 = vadd.f32 %v438, %v505
  %v515 = vld [vmem:[%s7] sm:$0x1]
  %v516 = vld [vmem:[%s8] sm:$0x1]
  %s517 = sld [smem:[#allocation2]]
  %v519 = vperm.slane %v515, 0
  %v521 = vadd.f32 %v507, %v519
  %v522 = vadd.f32 %v508, %v519
  %v523 = vadd.f32 %v509, %v519
  %v524 = vadd.f32 %v510, %v519
  %v525 = vadd.f32 %v511, %v519
  %v526 = vadd.f32 %v512, %v519
  %v527 = vadd.f32 %v513, %v519
  %v528 = vadd.f32 %v514, %v519
  %v529 = vmax.f32 %v521, 0.0
  %v530 = vmax.f32 %v522, 0.0
  %v531 = vmax.f32 %v523, 0.0
  %v532 = vmax.f32 %v524, 0.0
  %v533 = vmax.f32 %v525, 0.0
  %v534 = vmax.f32 %v526, 0.0
  %v535 = vmax.f32 %v527, 0.0
  %v536 = vmax.f32 %v528, 0.0
  %v538 = vperm.slane %v516, 0
  %v540 = vmul.f32 %v529, %v538
  %v541 = vmul.f32 %v530, %v538
  %v542 = vmul.f32 %v531, %v538
  %v543 = vmul.f32 %v532, %v538
  %v544 = vmul.f32 %v533, %v538
  %v545 = vmul.f32 %v534, %v538
  %v546 = vmul.f32 %v535, %v538
  %v547 = vmul.f32 %v536, %v538
  %vm548 = vcmask 261120
  %v549 = vsel %vm548, %v540, 0.0
  %550 = vadd.xlane.f32.xlu0 %v549
  %v551 = vpop.xlane.xlu0 %550
  %v552 = vsel %vm548, %v541, 0.0
  %553 = vadd.xlane.f32.xlu0 %v552
  %v554 = vpop.xlane.xlu0 %553
  %v555 = vsel %vm548, %v542, 0.0
  %556 = vadd.xlane.f32.xlu0 %v555
  %v557 = vpop.xlane.xlu0 %556
  %v558 = vsel %vm548, %v543, 0.0
  %559 = vadd.xlane.f32.xlu0 %v558
  %v560 = vpop.xlane.xlu0 %559
  %v561 = vsel %vm548, %v544, 0.0
  %562 = vadd.xlane.f32.xlu0 %v561
  %v563 = vpop.xlane.xlu0 %562
  %v564 = vsel %vm548, %v545, 0.0
  %565 = vadd.xlane.f32.xlu0 %v564
  %v566 = vpop.xlane.xlu0 %565
  %v567 = vsel %vm548, %v546, 0.0
  %568 = vadd.xlane.f32.xlu0 %v567
  %v569 = vpop.xlane.xlu0 %568
  %v570 = vsel %vm548, %v547, 0.0
  %571 = vadd.xlane.f32.xlu0 %v570
  %v572 = vpop.xlane.xlu0 %571
  %v573 = vstv %s517
  %v574 = vadd.f32 %v551, %v573
  %v575 = vadd.f32 %v554, %v573
  %v576 = vadd.f32 %v557, %v573
  %v577 = vadd.f32 %v560, %v573
  %v578 = vadd.f32 %v563, %v573
  %v579 = vadd.f32 %v566, %v573
  %v580 = vadd.f32 %v569, %v573
  %v581 = vadd.f32 %v572, %v573
  %v582 = vxor.u32 %v574, 2147483648
  %v583 = vxor.u32 %v575, 2147483648
  %v584 = vxor.u32 %v576, 2147483648
  %v585 = vxor.u32 %v577, 2147483648
  %v586 = vxor.u32 %v578, 2147483648
  %v587 = vxor.u32 %v579, 2147483648
  %v588 = vxor.u32 %v580, 2147483648
  %v589 = vxor.u32 %v581, 2147483648
  %v590 = vmul.f32 %v582, 1.442695
  %v591 = vpow.pop %v590
  %v592 = vmul.f32 %v583, 1.442695
  %v593 = vpow.pop %v592
  %v594 = vmul.f32 %v584, 1.442695
  %v595 = vpow.pop %v594
  %v596 = vmul.f32 %v585, 1.442695
  %v597 = vpow.pop %v596
  %v598 = vmul.f32 %v586, 1.442695
  %v599 = vpow.pop %v598
  %v600 = vmul.f32 %v587, 1.442695
  %v601 = vpow.pop %v600
  %v602 = vmul.f32 %v588, 1.442695
  %v603 = vpow.pop %v602
  %v604 = vmul.f32 %v589, 1.442695
  %v605 = vpow.pop %v604
  %v606 = vadd.f32 %v591, 1.0
  %v607 = vadd.f32 %v593, 1.0
  %v608 = vadd.f32 %v595, 1.0
  %v609 = vadd.f32 %v597, 1.0
  %v610 = vadd.f32 %v599, 1.0
  %v611 = vadd.f32 %v601, 1.0
  %v612 = vadd.f32 %v603, 1.0
  %v613 = vadd.f32 %v605, 1.0
  %v614 = vrcp.pop %v606
  %v615 = vmul.f32 %v606, %v614
  %v616 = vsub.f32 1.0, %v615
  %v617 = vmul.f32 %v614, %v616
  %v618 = vadd.f32 %v614, %v617
  %vm619 = vweird.f32 %v606
  %vm620 = vweird.f32 %v614
  %vm621 = vmor %vm619, %vm620
  %v622 = vsel %vm621, %v614, %v618
  %v623 = vand.u32 2147483647, %v606
  %vm624 = vcmp.eq.f32.partialorder %v623, 8.507059e+37
  %v625 = vand.u32 %v606, 2147483648
  %v626 = vor.u32 1.1754944e-38, %v625
  %v627 = vsel %vm624, %v626, %v622
  %v628 = vmul.f32 1.0, %v627
  %v629 = vrcp.pop %v607
  %v630 = vmul.f32 %v607, %v629
  %v631 = vsub.f32 1.0, %v630
  %v632 = vmul.f32 %v629, %v631
  %v633 = vadd.f32 %v629, %v632
  %vm634 = vweird.f32 %v607
  %vm635 = vweird.f32 %v629
  %vm636 = vmor %vm634, %vm635
  %v637 = vsel %vm636, %v629, %v633
  %v638 = vand.u32 2147483647, %v607
  %vm639 = vcmp.eq.f32.partialorder %v638, 8.507059e+37
  %v640 = vand.u32 %v607, 2147483648
  %v641 = vor.u32 1.1754944e-38, %v640
  %v642 = vsel %vm639, %v641, %v637
  %v643 = vmul.f32 1.0, %v642
  %v644 = vrcp.pop %v608
  %v645 = vmul.f32 %v608, %v644
  %v646 = vsub.f32 1.0, %v645
  %v647 = vmul.f32 %v644, %v646
  %v648 = vadd.f32 %v644, %v647
  %vm649 = vweird.f32 %v608
  %vm650 = vweird.f32 %v644
  %vm651 = vmor %vm649, %vm650
  %v652 = vsel %vm651, %v644, %v648
  %v653 = vand.u32 2147483647, %v608
  %vm654 = vcmp.eq.f32.partialorder %v653, 8.507059e+37
  %v655 = vand.u32 %v608, 2147483648
  %v656 = vor.u32 1.1754944e-38, %v655
  %v657 = vsel %vm654, %v656, %v652
  %v658 = vmul.f32 1.0, %v657
  %v659 = vrcp.pop %v609
  %v660 = vmul.f32 %v609, %v659
  %v661 = vsub.f32 1.0, %v660
  %v662 = vmul.f32 %v659, %v661
  %v663 = vadd.f32 %v659, %v662
  %vm664 = vweird.f32 %v609
  %vm665 = vweird.f32 %v659
  %vm666 = vmor %vm664, %vm665
  %v667 = vsel %vm666, %v659, %v663
  %v668 = vand.u32 2147483647, %v609
  %vm669 = vcmp.eq.f32.partialorder %v668, 8.507059e+37
  %v670 = vand.u32 %v609, 2147483648
  %v671 = vor.u32 1.1754944e-38, %v670
  %v672 = vsel %vm669, %v671, %v667
  %v673 = vmul.f32 1.0, %v672
  %v674 = vrcp.pop %v610
  %v675 = vmul.f32 %v610, %v674
  %v676 = vsub.f32 1.0, %v675
  %v677 = vmul.f32 %v674, %v676
  %v678 = vadd.f32 %v674, %v677
  %vm679 = vweird.f32 %v610
  %vm680 = vweird.f32 %v674
  %vm681 = vmor %vm679, %vm680
  %v682 = vsel %vm681, %v674, %v678
  %v683 = vand.u32 2147483647, %v610
  %vm684 = vcmp.eq.f32.partialorder %v683, 8.507059e+37
  %v685 = vand.u32 %v610, 2147483648
  %v686 = vor.u32 1.1754944e-38, %v685
  %v687 = vsel %vm684, %v686, %v682
  %v688 = vmul.f32 1.0, %v687
  %v689 = vrcp.pop %v611
  %v690 = vmul.f32 %v611, %v689
  %v691 = vsub.f32 1.0, %v690
  %v692 = vmul.f32 %v689, %v691
  %v693 = vadd.f32 %v689, %v692
  %vm694 = vweird.f32 %v611
  %vm695 = vweird.f32 %v689
  %vm696 = vmor %vm694, %vm695
  %v697 = vsel %vm696, %v689, %v693
  %v698 = vand.u32 2147483647, %v611
  %vm699 = vcmp.eq.f32.partialorder %v698, 8.507059e+37
  %v700 = vand.u32 %v611, 2147483648
  %v701 = vor.u32 1.1754944e-38, %v700
  %v702 = vsel %vm699, %v701, %v697
  %v703 = vmul.f32 1.0, %v702
  %v704 = vrcp.pop %v612
  %v705 = vmul.f32 %v612, %v704
  %v706 = vsub.f32 1.0, %v705
  %v707 = vmul.f32 %v704, %v706
  %v708 = vadd.f32 %v704, %v707
  %vm709 = vweird.f32 %v612
  %vm710 = vweird.f32 %v704
  %vm711 = vmor %vm709, %vm710
  %v712 = vsel %vm711, %v704, %v708
  %v713 = vand.u32 2147483647, %v612
  %vm714 = vcmp.eq.f32.partialorder %v713, 8.507059e+37
  %v715 = vand.u32 %v612, 2147483648
  %v716 = vor.u32 1.1754944e-38, %v715
  %v717 = vsel %vm714, %v716, %v712
  %v718 = vmul.f32 1.0, %v717
  %v719 = vrcp.pop %v613
  %v720 = vmul.f32 %v613, %v719
  %v721 = vsub.f32 1.0, %v720
  %v722 = vmul.f32 %v719, %v721
  %v723 = vadd.f32 %v719, %v722
  %vm724 = vweird.f32 %v613
  %vm725 = vweird.f32 %v719
  %vm726 = vmor %vm724, %vm725
  %v727 = vsel %vm726, %v719, %v723
  %v728 = vand.u32 2147483647, %v613
  %vm729 = vcmp.eq.f32.partialorder %v728, 8.507059e+37
  %v730 = vand.u32 %v613, 2147483648
  %v731 = vor.u32 1.1754944e-38, %v730
  %v732 = vsel %vm729, %v731, %v727
  %v733 = vmul.f32 1.0, %v732
  %v734 = vmul.f32 %v36, %v628
  %v735 = vmul.f32 %v37, %v643
  %v736 = vmul.f32 %v38, %v658
  %v737 = vmul.f32 %v39, %v673
  %v738 = vmul.f32 %v40, %v688
  %v739 = vmul.f32 %v41, %v703
  %v740 = vmul.f32 %v42, %v718
  %v741 = vmul.f32 %v43, %v733
  %742 = vst.msk [vmem:[%s10] sm:$0xff] %vm441, %v734
  %743 = vst.msk [vmem:[%s10 + $0x8] sm:$0xff] %vm441, %v735
  %744 = vst.msk [vmem:[%s10 + $0x10] sm:$0xff] %vm441, %v736
  %745 = vst.msk [vmem:[%s10 + $0x18] sm:$0xff] %vm441, %v737
  %746 = vst.msk [vmem:[%s10 + $0x20] sm:$0xff] %vm441, %v738
  %747 = vst.msk [vmem:[%s10 + $0x28] sm:$0xff] %vm441, %v739
  %748 = vst.msk [vmem:[%s10 + $0x30] sm:$0xff] %vm441, %v740
  %749 = vst.msk [vmem:[%s10 + $0x38] sm:$0xff] %vm441, %v741
  // Predicated region
  $region42: #{tpu_custom_call.1} parent=0 // pred_check
    _
  $region43: #{tpu_custom_call.1} parent=0 // pred_check_branch
    %751 = sbr.rel (0) target = $region45
  $region44: #{tpu_custom_call.1} parent=0 // pred_region
    _
  $region45: #{tpu_custom_call.1} parent=0 // pred_fallthru
    _
  // Predicated region
  $region46: #{tpu_custom_call.1} parent=0 // pred_check
    _
  $region47: #{tpu_custom_call.1} parent=0 // pred_check_branch
    %753 = sbr.rel (0) target = $region49
  $region48: #{tpu_custom_call.1} parent=0 // pred_region
    _
  $region49: #{tpu_custom_call.1} parent=0 // pred_fallthru
    _

</llo_original>
